<compile_context>
chip_gen: v7x
topology: tpu7x:2x2x1
jax: 0.10.0
libtpu: 0.0.40
codegen_flags: <defaults>
</compile_context>

<pallas_src>
import functools

import jax
import jax.numpy as jnp
from jax.experimental import pallas as pl
from jax.experimental.pallas import tpu as pltpu


def _round_up(x, m):
    return ((x + m - 1) // m) * m


def _pad_to(a, shape):
    pads = [(0, s - d) for d, s in zip(a.shape, shape)]
    return jnp.pad(a, pads)


# ----------------------------------------------------------------------------
# Kernel 1: one GraphConv layer.
#   acc = sum_k A[i, k] @ H[k]                 (reduction over node tiles k)
#   out[i] = relu?( acc @ W_rel + H[i] @ W_root + b )
# Two bodies: resident-H (H lives whole in VMEM, sliced in-kernel) and
# streaming-H (H re-streamed per tile via BlockSpecs).
# ----------------------------------------------------------------------------
def _conv_kernel_resident(a_ref, h_ref, wr_ref, wx_ref, b_ref, out_ref,
                          acc_ref, *, tm, tk, apply_relu):
    i = pl.program_id(0)
    k = pl.program_id(1)

    @pl.when(k == 0)
    def _():
        acc_ref[...] = jnp.zeros_like(acc_ref)

    # int8 A tile -> bf16 (VPU, hides under DMA); bf16 x bf16 MXU, f32 acc.
    a = a_ref[...].astype(jnp.bfloat16)
    koff = pl.multiple_of(k * tk, tk)
    hk = h_ref[pl.ds(koff, tk), :]
    acc_ref[...] += jnp.dot(a, hk, preferred_element_type=jnp.float32)

    @pl.when(k == pl.num_programs(1) - 1)
    def _():
        ioff = pl.multiple_of(i * tm, tm)
        hi = h_ref[pl.ds(ioff, tm), :]
        h = (jnp.dot(acc_ref[...].astype(jnp.bfloat16), wr_ref[...],
                     preferred_element_type=jnp.float32)
             + jnp.dot(hi, wx_ref[...], preferred_element_type=jnp.float32)
             + b_ref[...])
        if apply_relu:
            h = jnp.maximum(h, 0.0)
        out_ref[...] = h.astype(out_ref.dtype)


def _conv_kernel_stream(a_ref, hk_ref, hi_ref, wr_ref, wx_ref, b_ref, out_ref,
                        acc_ref, *, apply_relu):
    k = pl.program_id(1)

    @pl.when(k == 0)
    def _():
        acc_ref[...] = jnp.zeros_like(acc_ref)

    acc_ref[...] += jnp.dot(a_ref[...].astype(jnp.bfloat16), hk_ref[...],
                            preferred_element_type=jnp.float32)

    @pl.when(k == pl.num_programs(1) - 1)
    def _():
        h = (jnp.dot(acc_ref[...].astype(jnp.bfloat16), wr_ref[...],
                     preferred_element_type=jnp.float32)
             + jnp.dot(hi_ref[...], wx_ref[...],
                       preferred_element_type=jnp.float32)
             + b_ref[...])
        if apply_relu:
            h = jnp.maximum(h, 0.0)
        out_ref[...] = h.astype(out_ref.dtype)


def _graph_conv_layer(adj, h, w_rel, w_root, b, *, out_dtype, apply_relu,
                      tm, tk, resident_h):
    n_pad = adj.shape[0]
    f_in = h.shape[1]
    f_out = w_rel.shape[1]
    grid = (n_pad // tm, n_pad // tk)
    out_itemsize = jnp.dtype(out_dtype).itemsize

    if resident_h:
        kernel = functools.partial(_conv_kernel_resident, tm=tm, tk=tk,
                                   apply_relu=apply_relu)
        in_specs = [
            pl.BlockSpec((tm, tk), lambda i, k: (i, k)),          # A tile (int8)
            pl.BlockSpec((n_pad, f_in), lambda i, k: (0, 0)),     # H, VMEM-resident
            pl.BlockSpec((f_in, f_out), lambda i, k: (0, 0)),     # W_rel (bf16)
            pl.BlockSpec((f_in, f_out), lambda i, k: (0, 0)),     # W_root (bf16)
            pl.BlockSpec((1, f_out), lambda i, k: (0, 0)),        # bias (f32)
        ]
        args = (adj, h, w_rel, w_root, b)
        h_bytes = 2 * n_pad * f_in * 2
        h_hbm_bytes = n_pad * f_in * 2
    else:
        kernel = functools.partial(_conv_kernel_stream, apply_relu=apply_relu)
        in_specs = [
            pl.BlockSpec((tm, tk), lambda i, k: (i, k)),          # A tile (int8)
            pl.BlockSpec((tk, f_in), lambda i, k: (k, 0)),        # H (aggregation)
            pl.BlockSpec((tm, f_in), lambda i, k: (i, 0)),        # H (root rows)
            pl.BlockSpec((f_in, f_out), lambda i, k: (0, 0)),
            pl.BlockSpec((f_in, f_out), lambda i, k: (0, 0)),
            pl.BlockSpec((1, f_out), lambda i, k: (0, 0)),
        ]
        args = (adj, h, h, w_rel, w_root, b)
        h_bytes = 2 * (tm + tk) * f_in * 2
        h_hbm_bytes = (grid[0] + 1) * n_pad * f_in * 2

    # Explicit VMEM budget for the enlarged tiles (double-buffered inputs/outputs
    # + f32 accumulator); floor 32 MiB so we never sit below chip defaults, cap
    # 64 MiB (v7x physical VMEM per TensorCore).
    footprint = (2 * tm * tk * adj.dtype.itemsize          # A double-buffered
                 + h_bytes                                  # H buffers
                 + 2 * 2 * f_in * f_out * 2                 # W_rel + W_root bf16
                 + 2 * f_out * 4                            # bias
                 + 2 * tm * f_out * out_itemsize            # output tile
                 + tm * f_in * 4)                           # acc scratch
    vmem_limit = int(min(max(footprint + (4 << 20), 32 << 20), 64 << 20))

    flops = 2 * n_pad * n_pad * f_in + 2 * 2 * n_pad * f_in * f_out
    bytes_accessed = int(n_pad * n_pad * adj.dtype.itemsize
                         + h_hbm_bytes
                         + 2 * 2 * f_in * f_out + f_out * 4
                         + n_pad * f_out * out_itemsize)

    return pl.pallas_call(
        kernel,
        out_shape=jax.ShapeDtypeStruct((n_pad, f_out), out_dtype),
        grid_spec=pltpu.PrefetchScalarGridSpec(
            num_scalar_prefetch=0,
            grid=grid,
            in_specs=in_specs,
            out_specs=pl.BlockSpec((tm, f_out), lambda i, k: (i, 0)),
            scratch_shapes=[pltpu.VMEM((tm, f_in), jnp.float32)],
        ),
        compiler_params=pltpu.CompilerParams(
            dimension_semantics=("parallel", "arbitrary"),
            vmem_limit_bytes=vmem_limit),
        cost_estimate=pl.CostEstimate(
            flops=flops, transcendentals=0, bytes_accessed=bytes_accessed),
    )(*args)


# ----------------------------------------------------------------------------
# Kernel 2: global_mean_pool + (eval-mode) dropout + final Linear.
#   acc = sum_k P01[:, k] @ H[k]   ;   out = (acc / counts) @ Wl + bl
# ----------------------------------------------------------------------------
def _pool_lin_kernel(p_ref, h_ref, cnt_ref, wl_ref, bl_ref, out_ref, acc_ref):
    k = pl.program_id(0)

    @pl.when(k == 0)
    def _():
        acc_ref[...] = jnp.zeros_like(acc_ref)

    acc_ref[...] += jnp.dot(p_ref[...], h_ref[...],
                            preferred_element_type=jnp.float32)

    @pl.when(k == pl.num_programs(0) - 1)
    def _():
        # Exact mean: 0/1 weights, f32 accumulation, divide by counts at the end.
        pooled = (acc_ref[...] / cnt_ref[...]).astype(jnp.bfloat16)
        # ---- dropout (eval mode -> identity) ----
        # TODO(synk): training-mode dropout (p=0.5) not implemented; eval semantics.
        out_ref[...] = (jnp.dot(pooled, wl_ref[...],
                                preferred_element_type=jnp.float32)
                        + bl_ref[...]).astype(out_ref.dtype)


def _pool_and_linear(pool01, h, counts, wl, bl, *, tk):
    n_graphs = pool01.shape[0]
    n_pad = pool01.shape[1]
    f_in = h.shape[1]
    f_out = wl.shape[1]
    grid = (n_pad // tk,)

    return pl.pallas_call(
        _pool_lin_kernel,
        out_shape=jax.ShapeDtypeStruct((n_graphs, f_out), jnp.float32),
        grid_spec=pltpu.PrefetchScalarGridSpec(
            num_scalar_prefetch=0,
            grid=grid,
            in_specs=[
                pl.BlockSpec((n_graphs, tk), lambda k: (0, k)),   # P01 (bf16)
                pl.BlockSpec((tk, f_in), lambda k: (k, 0)),       # H3 (bf16)
                pl.BlockSpec((n_graphs, 1), lambda k: (0, 0)),    # counts (f32)
                pl.BlockSpec((f_in, f_out), lambda k: (0, 0)),    # Wl (bf16)
                pl.BlockSpec((1, f_out), lambda k: (0, 0)),       # bl (f32)
            ],
            out_specs=pl.BlockSpec((n_graphs, f_out), lambda k: (0, 0)),
            scratch_shapes=[pltpu.VMEM((n_graphs, f_in), jnp.float32)],
        ),
        compiler_params=pltpu.CompilerParams(
            dimension_semantics=("arbitrary",)),
    )(pool01, h, counts, wl, bl)


# ----------------------------------------------------------------------------
# Wrapper: glue (int8 dense adjacency, 0/1 pooling one-hot + counts, padding,
# bf16 weight prep) + three conv layers + pool/linear.
# ----------------------------------------------------------------------------
@functools.partial(jax.jit, static_argnames=("num_graphs",))
def vanilla_graph_conv_forward(x, edge_index, batch, params, num_graphs):
    """x: [N, n_f] f32, edge_index: [2, E] int32 (row0=src, row1=dst), batch: [N] int32."""
    N, n_f = x.shape
    (w1r, w1x, b1, w2r, w2x, b2, w3r, w3x, b3, wl, bl) = params
    hidden = w1r.shape[1]
    n_hlin = w3r.shape[1]
    n_pred = wl.shape[1]

    # --- tile sizes / padded node count (tm is the padding quantum, tk | n_pad) ---
    if N >= 2048:
        tm = 512
    elif N >= 512:
        tm = 256
    else:
        tm = 128
    n_pad = _round_up(N, tm)
    tk = 2048
    while n_pad % tk:
        tk //= 2

    # --- lane-dense feature padding (multiples of 128) ---
    f0 = _round_up(n_f, 128)
    f1 = _round_up(hidden, 128)
    f3 = _round_up(n_hlin, 128)
    fp = _round_up(n_pred, 128)

    # --- glue: int8 dense adjacency A[i, j] = #edges j -> i ---
    # (exact for multi-edge counts up to 127; simple graphs are 0/1)
    src, dst = edge_index[0], edge_index[1]
    adj = jnp.zeros((n_pad, n_pad), jnp.int8).at[dst, src].add(
        jnp.ones(src.shape, jnp.int8))

    # --- glue: 0/1 bf16 pooling one-hot + f32 per-graph counts (padded nodes -> 0) ---
    batch_pad = jnp.full((n_pad,), -1, jnp.int32).at[:N].set(batch)
    one_hot = (batch_pad[None, :]
               == jnp.arange(num_graphs, dtype=jnp.int32)[:, None])
    counts = jnp.maximum(
        one_hot.sum(axis=1, keepdims=True).astype(jnp.float32), 1.0)
    pool01 = one_hot.astype(jnp.bfloat16)

    # --- padded inputs / bf16 weights (rel and root kept separate) ---
    x_p = _pad_to(x, (n_pad, f0)).astype(jnp.bfloat16)

    def prep_w(w, shape):
        return _pad_to(w, shape).astype(jnp.bfloat16)

    w1r_p, w1x_p = prep_w(w1r, (f0, f1)), prep_w(w1x, (f0, f1))
    w2r_p, w2x_p = prep_w(w2r, (f1, f1)), prep_w(w2x, (f1, f1))
    w3r_p, w3x_p = prep_w(w3r, (f1, f3)), prep_w(w3x, (f1, f3))
    b1_p = _pad_to(b1, (1, f1))
    b2_p = _pad_to(b2, (1, f1))
    b3_p = _pad_to(b3, (1, f3))
    wl_p = prep_w(wl, (f3, fp))
    bl_p = _pad_to(bl, (1, fp))

    # Keep H VMEM-resident unless its double-buffered bf16 copy exceeds ~8 MiB.
    def resident(f_in):
        return 2 * n_pad * f_in * 2 <= (8 << 20)

    # --- three tiled GraphConv layers (bf16 activations between layers) ---
    h1 = _graph_conv_layer(adj, x_p, w1r_p, w1x_p, b1_p,
                           out_dtype=jnp.bfloat16, apply_relu=True,
                           tm=tm, tk=tk, resident_h=resident(f0))
    h2 = _graph_conv_layer(adj, h1, w2r_p, w2x_p, b2_p,
                           out_dtype=jnp.bfloat16, apply_relu=True,
                           tm=tm, tk=tk, resident_h=resident(f1))
    h3 = _graph_conv_layer(adj, h2, w3r_p, w3x_p, b3_p,
                           out_dtype=jnp.bfloat16, apply_relu=False,
                           tm=tm, tk=tk, resident_h=resident(f1))

    # --- global_mean_pool + (eval-mode) dropout + final Linear ---
    out_pad = _pool_and_linear(pool01, h3, counts, wl_p, bl_p, tk=tk)
    return out_pad[:, :n_pred]


def init_params(key, n_f, hidden_channels, n_hlin, n_pred):
    """Deterministic synthetic init. Weights stored as (in, out); biases as (1, out)."""
    ks = jax.random.split(key, 8)

    def lin_w(k, fan_in, fan_out):
        bound = 1.0 / jnp.sqrt(fan_in)
        return jax.random.uniform(k, (fan_in, fan_out), jnp.float32, -bound, bound)

    w1r = lin_w(ks[0], n_f, hidden_channels)              # lin_rel (with bias)
    w1x = lin_w(ks[1], n_f, hidden_channels)              # lin_root (no bias)
    b1 = jnp.zeros((1, hidden_channels), jnp.float32)
    w2r = lin_w(ks[2], hidden_channels, hidden_channels)
    w2x = lin_w(ks[3], hidden_channels, hidden_channels)
    b2 = jnp.zeros((1, hidden_channels), jnp.float32)
    w3r = lin_w(ks[4], hidden_channels, n_hlin)
    w3x = lin_w(ks[5], hidden_channels, n_hlin)
    b3 = jnp.zeros((1, n_hlin), jnp.float32)
    wl = lin_w(ks[6], n_hlin, n_pred)                     # final Linear weight
    bound_l = 1.0 / jnp.sqrt(n_hlin)
    bl = jax.random.uniform(ks[7], (1, n_pred), jnp.float32, -bound_l, bound_l)
    return (w1r, w1x, b1, w2r, w2x, b2, w3r, w3x, b3, wl, bl)


if __name__ == "__main__":
    key = jax.random.PRNGKey(0)
    k_x, k_p = jax.random.split(key)

    # Small synthetic graph batch: 2 graphs, 8 nodes each.
    n_f, hidden_channels, n_hlin, n_pred = 8, 32, 32, 4
    nodes_per_graph, num_graphs = 8, 2
    N = nodes_per_graph * num_graphs

    x = jax.random.normal(k_x, (N, n_f), jnp.float32)
    batch = jnp.repeat(jnp.arange(num_graphs, dtype=jnp.int32), nodes_per_graph)

    # Bidirectional ring within each graph.
    src_list, dst_list = [], []
    for g in range(num_graphs):
        base = g * nodes_per_graph
        for i in range(nodes_per_graph):
            j = (i + 1) % nodes_per_graph
            src_list += [base + i, base + j]
            dst_list += [base + j, base + i]
    edge_index = jnp.array([src_list, dst_list], dtype=jnp.int32)  # [2, E]

    params = init_params(k_p, n_f, hidden_channels, n_hlin, n_pred)

    out = vanilla_graph_conv_forward(x, edge_index, batch, params, num_graphs)
    jax.block_until_ready(out)
    assert out.shape == (num_graphs, n_pred)
    print("KERNEL_OK")
</pallas_src>

<mosaic_0001>
module attributes {stable_mosaic.version = 11 : i64} {
  func.func @_conv_kernel_resident(%arg0: i32, %arg1: i32, %arg2: memref<128x128xi8, #tpu.memory_space<vmem>>, %arg3: memref<128x128xbf16, #tpu.memory_space<vmem>>, %arg4: memref<128x128xbf16, #tpu.memory_space<vmem>>, %arg5: memref<128x128xbf16, #tpu.memory_space<vmem>>, %arg6: memref<1x128xf32, #tpu.memory_space<vmem>>, %arg7: memref<128x128xbf16, #tpu.memory_space<vmem>>, %arg8: memref<128x128xf32, #tpu.memory_space<vmem>>) attributes {dimension_semantics = [#tpu.dimension_semantics<parallel>, #tpu.dimension_semantics<arbitrary>], iteration_bounds = array<i64: 1, 1>, scalar_prefetch = 0 : i64, scratch_operands = 1 : i64, tpu.core_type = #tpu.core_type<tc>, window_params = [{transform_indices = @transform_0, window_bounds = array<i64: 128, 128>}, {pipeline_mode = #tpu.pipeline_mode<synchronous>, transform_indices = @transform_1, window_bounds = array<i64: 128, 128>}, {pipeline_mode = #tpu.pipeline_mode<synchronous>, transform_indices = @transform_2, window_bounds = array<i64: 128, 128>}, {pipeline_mode = #tpu.pipeline_mode<synchronous>, transform_indices = @transform_3, window_bounds = array<i64: 128, 128>}, {pipeline_mode = #tpu.pipeline_mode<synchronous>, transform_indices = @transform_4, window_bounds = array<i64: 1, 128>}, {transform_indices = @transform_5, window_bounds = array<i64: 128, 128>}]} {
    %c0_i32 = arith.constant 0 : i32
    %0 = arith.cmpi eq, %arg1, %c0_i32 : i32
    %1 = arith.extui %0 : i1 to i32
    %c0_i32_0 = arith.constant 0 : i32
    %2 = arith.cmpi ne, %1, %c0_i32_0 : i32
    scf.if %2 {
      %cst_9 = arith.constant 0.000000e+00 : f32
      %16 = vector.broadcast %cst_9 : f32 to vector<128x128xf32>
      %c0_10 = arith.constant 0 : index
      %c0_11 = arith.constant 0 : index
      %17 = vector.load %arg8[%c0_10, %c0_11] : memref<128x128xf32, #tpu.memory_space<vmem>>, vector<128x128xf32>
      tpu.vector_store %arg8[%c0_10, %c0_11], %16 {strides = array<i32>} : memref<128x128xf32, #tpu.memory_space<vmem>>, vector<128x128xf32>,
    } else {
    }
    %c0 = arith.constant 0 : index
    %c0_1 = arith.constant 0 : index
    %3 = vector.load %arg2[%c0, %c0_1] : memref<128x128xi8, #tpu.memory_space<vmem>>, vector<128x128xi8>
    %4 = arith.sitofp %3 : vector<128x128xi8> to vector<128x128xbf16>
    %c128_i32 = arith.constant 128 : i32
    %5 = arith.muli %arg1, %c128_i32 : i32
    %6 = tpu.assume_multiple %5, 128 : i32
    %7 = arith.index_cast %6 : i32 to index
    %c0_2 = arith.constant 0 : index
    %8 = vector.load %arg3[%7, %c0_2] : memref<128x128xbf16, #tpu.memory_space<vmem>>, vector<128x128xbf16>
    %c0_3 = arith.constant 0 : index
    %c0_4 = arith.constant 0 : index
    %9 = vector.load %arg8[%c0_3, %c0_4] : memref<128x128xf32, #tpu.memory_space<vmem>>, vector<128x128xf32>
    %cst = arith.constant dense<0.000000e+00> : vector<128x128xf32>
    %10 = tpu.matmul %4, %8, %cst {dimension_numbers = #tpu.dot_dimension_numbers<[1], [0], [0], [1], [0, 0, 1, 1], [], []>} : vector<128x128xbf16>, vector<128x128xbf16>, vector<128x128xf32> -> vector<128x128xf32>
    %11 = arith.addf %9, %10 : vector<128x128xf32>
    %c0_5 = arith.constant 0 : index
    %c0_6 = arith.constant 0 : index
    %12 = vector.load %arg8[%c0_5, %c0_6] : memref<128x128xf32, #tpu.memory_space<vmem>>, vector<128x128xf32>
    tpu.vector_store %arg8[%c0_5, %c0_6], %11 {strides = array<i32>} : memref<128x128xf32, #tpu.memory_space<vmem>>, vector<128x128xf32>,
    %c0_i32_7 = arith.constant 0 : i32
    %13 = arith.cmpi eq, %arg1, %c0_i32_7 : i32
    %14 = arith.extui %13 : i1 to i32
    %c0_i32_8 = arith.constant 0 : i32
    %15 = arith.cmpi ne, %14, %c0_i32_8 : i32
    scf.if %15 {
      %c128_i32_9 = arith.constant 128 : i32
      %16 = arith.muli %arg0, %c128_i32_9 : i32
      %17 = tpu.assume_multiple %16, 128 : i32
      %18 = arith.index_cast %17 : i32 to index
      %c0_10 = arith.constant 0 : index
      %19 = vector.load %arg3[%18, %c0_10] : memref<128x128xbf16, #tpu.memory_space<vmem>>, vector<128x128xbf16>
      %c0_11 = arith.constant 0 : index
      %c0_12 = arith.constant 0 : index
      %20 = vector.load %arg8[%c0_11, %c0_12] : memref<128x128xf32, #tpu.memory_space<vmem>>, vector<128x128xf32>
      %21 = arith.truncf %20 : vector<128x128xf32> to vector<128x128xbf16>
      %c0_13 = arith.constant 0 : index
      %c0_14 = arith.constant 0 : index
      %22 = vector.load %arg4[%c0_13, %c0_14] : memref<128x128xbf16, #tpu.memory_space<vmem>>, vector<128x128xbf16>
      %cst_15 = arith.constant dense<0.000000e+00> : vector<128x128xf32>
      %23 = tpu.matmul %21, %22, %cst_15 {dimension_numbers = #tpu.dot_dimension_numbers<[1], [0], [0], [1], [0, 0, 1, 1], [], []>} : vector<128x128xbf16>, vector<128x128xbf16>, vector<128x128xf32> -> vector<128x128xf32>
      %c0_16 = arith.constant 0 : index
      %c0_17 = arith.constant 0 : index
      %24 = vector.load %arg5[%c0_16, %c0_17] : memref<128x128xbf16, #tpu.memory_space<vmem>>, vector<128x128xbf16>
      %cst_18 = arith.constant dense<0.000000e+00> : vector<128x128xf32>
      %25 = tpu.matmul %19, %24, %cst_18 {dimension_numbers = #tpu.dot_dimension_numbers<[1], [0], [0], [1], [0, 0, 1, 1], [], []>} : vector<128x128xbf16>, vector<128x128xbf16>, vector<128x128xf32> -> vector<128x128xf32>
      %26 = arith.addf %23, %25 : vector<128x128xf32>
      %c0_19 = arith.constant 0 : index
      %c0_20 = arith.constant 0 : index
      %27 = vector.load %arg6[%c0_19, %c0_20] : memref<1x128xf32, #tpu.memory_space<vmem>>, vector<1x128xf32>
      %28 = vector.broadcast %27 : vector<1x128xf32> to vector<128x128xf32>
      %29 = arith.addf %26, %28 : vector<128x128xf32>
      %cst_21 = arith.constant 0.000000e+00 : f32
      %30 = vector.broadcast %cst_21 : f32 to vector<128x128xf32>
      %31 = arith.maximumf %29, %30 : vector<128x128xf32>
      %32 = arith.truncf %31 : vector<128x128xf32> to vector<128x128xbf16>
      %c0_22 = arith.constant 0 : index
      %c0_23 = arith.constant 0 : index
      %33 = vector.load %arg7[%c0_22, %c0_23] : memref<128x128xbf16, #tpu.memory_space<vmem>>, vector<128x128xbf16>
      tpu.vector_store %arg7[%c0_22, %c0_23], %32 {strides = array<i32>} : memref<128x128xbf16, #tpu.memory_space<vmem>>, vector<128x128xbf16>,
    } else {
    }
    return
  }
  func.func @transform_0(%arg0: i32, %arg1: i32) -> (i32, i32) {
    %c0_i32 = arith.constant 0 : i32
    return %arg0, %arg1 : i32, i32
  }
  func.func @transform_1(%arg0: i32, %arg1: i32) -> (i32, i32) {
    %c0_i32 = arith.constant 0 : i32
    %c0_i32_0 = arith.constant 0 : i32
    %c0_i32_1 = arith.constant 0 : i32
    return %c0_i32, %c0_i32_0 : i32, i32
  }
  func.func @transform_2(%arg0: i32, %arg1: i32) -> (i32, i32) {
    %c0_i32 = arith.constant 0 : i32
    %c0_i32_0 = arith.constant 0 : i32
    %c0_i32_1 = arith.constant 0 : i32
    return %c0_i32, %c0_i32_0 : i32, i32
  }
  func.func @transform_3(%arg0: i32, %arg1: i32) -> (i32, i32) {
    %c0_i32 = arith.constant 0 : i32
    %c0_i32_0 = arith.constant 0 : i32
    %c0_i32_1 = arith.constant 0 : i32
    return %c0_i32, %c0_i32_0 : i32, i32
  }
  func.func @transform_4(%arg0: i32, %arg1: i32) -> (i32, i32) {
    %c0_i32 = arith.constant 0 : i32
    %c0_i32_0 = arith.constant 0 : i32
    %c0_i32_1 = arith.constant 0 : i32
    return %c0_i32, %c0_i32_0 : i32, i32
  }
  func.func @transform_5(%arg0: i32, %arg1: i32) -> (i32, i32) {
    %c0_i32 = arith.constant 0 : i32
    %c0_i32_0 = arith.constant 0 : i32
    return %arg0, %c0_i32 : i32, i32
  }
}

module attributes {stable_mosaic.version = 11 : i64} {
  func.func @_conv_kernel_resident(%arg0: i32, %arg1: i32, %arg2: memref<128x128xi8, #tpu.memory_space<vmem>>, %arg3: memref<128x128xbf16, #tpu.memory_space<vmem>>, %arg4: memref<128x128xbf16, #tpu.memory_space<vmem>>, %arg5: memref<128x128xbf16, #tpu.memory_space<vmem>>, %arg6: memref<1x128xf32, #tpu.memory_space<vmem>>, %arg7: memref<128x128xbf16, #tpu.memory_space<vmem>>, %arg8: memref<128x128xf32, #tpu.memory_space<vmem>>) attributes {dimension_semantics = [#tpu.dimension_semantics<parallel>, #tpu.dimension_semantics<arbitrary>], iteration_bounds = array<i64: 1, 1>, scalar_prefetch = 0 : i64, scratch_operands = 1 : i64, tpu.core_type = #tpu.core_type<tc>, window_params = [{transform_indices = @transform_0, window_bounds = array<i64: 128, 128>}, {pipeline_mode = #tpu.pipeline_mode<synchronous>, transform_indices = @transform_1, window_bounds = array<i64: 128, 128>}, {pipeline_mode = #tpu.pipeline_mode<synchronous>, transform_indices = @transform_2, window_bounds = array<i64: 128, 128>}, {pipeline_mode = #tpu.pipeline_mode<synchronous>, transform_indices = @transform_3, window_bounds = array<i64: 128, 128>}, {pipeline_mode = #tpu.pipeline_mode<synchronous>, transform_indices = @transform_4, window_bounds = array<i64: 1, 128>}, {transform_indices = @transform_5, window_bounds = array<i64: 128, 128>}]} {
    %c0_i32 = arith.constant 0 : i32
    %0 = arith.cmpi eq, %arg1, %c0_i32 : i32
    %1 = arith.extui %0 : i1 to i32
    %c0_i32_0 = arith.constant 0 : i32
    %2 = arith.cmpi ne, %1, %c0_i32_0 : i32
    scf.if %2 {
      %cst_9 = arith.constant 0.000000e+00 : f32
      %16 = vector.broadcast %cst_9 : f32 to vector<128x128xf32>
      %c0_10 = arith.constant 0 : index
      %c0_11 = arith.constant 0 : index
      %17 = vector.load %arg8[%c0_10, %c0_11] : memref<128x128xf32, #tpu.memory_space<vmem>>, vector<128x128xf32>
      tpu.vector_store %arg8[%c0_10, %c0_11], %16 {strides = array<i32>} : memref<128x128xf32, #tpu.memory_space<vmem>>, vector<128x128xf32>,
    } else {
    }
    %c0 = arith.constant 0 : index
    %c0_1 = arith.constant 0 : index
    %3 = vector.load %arg2[%c0, %c0_1] : memref<128x128xi8, #tpu.memory_space<vmem>>, vector<128x128xi8>
    %4 = arith.sitofp %3 : vector<128x128xi8> to vector<128x128xbf16>
    %c128_i32 = arith.constant 128 : i32
    %5 = arith.muli %arg1, %c128_i32 : i32
    %6 = tpu.assume_multiple %5, 128 : i32
    %7 = arith.index_cast %6 : i32 to index
    %c0_2 = arith.constant 0 : index
    %8 = vector.load %arg3[%7, %c0_2] : memref<128x128xbf16, #tpu.memory_space<vmem>>, vector<128x128xbf16>
    %c0_3 = arith.constant 0 : index
    %c0_4 = arith.constant 0 : index
    %9 = vector.load %arg8[%c0_3, %c0_4] : memref<128x128xf32, #tpu.memory_space<vmem>>, vector<128x128xf32>
    %cst = arith.constant dense<0.000000e+00> : vector<128x128xf32>
    %10 = tpu.matmul %4, %8, %cst {dimension_numbers = #tpu.dot_dimension_numbers<[1], [0], [0], [1], [0, 0, 1, 1], [], []>} : vector<128x128xbf16>, vector<128x128xbf16>, vector<128x128xf32> -> vector<128x128xf32>
    %11 = arith.addf %9, %10 : vector<128x128xf32>
    %c0_5 = arith.constant 0 : index
    %c0_6 = arith.constant 0 : index
    %12 = vector.load %arg8[%c0_5, %c0_6] : memref<128x128xf32, #tpu.memory_space<vmem>>, vector<128x128xf32>
    tpu.vector_store %arg8[%c0_5, %c0_6], %11 {strides = array<i32>} : memref<128x128xf32, #tpu.memory_space<vmem>>, vector<128x128xf32>,
    %c0_i32_7 = arith.constant 0 : i32
    %13 = arith.cmpi eq, %arg1, %c0_i32_7 : i32
    %14 = arith.extui %13 : i1 to i32
    %c0_i32_8 = arith.constant 0 : i32
    %15 = arith.cmpi ne, %14, %c0_i32_8 : i32
    scf.if %15 {
      %c128_i32_9 = arith.constant 128 : i32
      %16 = arith.muli %arg0, %c128_i32_9 : i32
      %17 = tpu.assume_multiple %16, 128 : i32
      %18 = arith.index_cast %17 : i32 to index
      %c0_10 = arith.constant 0 : index
      %19 = vector.load %arg3[%18, %c0_10] : memref<128x128xbf16, #tpu.memory_space<vmem>>, vector<128x128xbf16>
      %c0_11 = arith.constant 0 : index
      %c0_12 = arith.constant 0 : index
      %20 = vector.load %arg8[%c0_11, %c0_12] : memref<128x128xf32, #tpu.memory_space<vmem>>, vector<128x128xf32>
      %21 = arith.truncf %20 : vector<128x128xf32> to vector<128x128xbf16>
      %c0_13 = arith.constant 0 : index
      %c0_14 = arith.constant 0 : index
      %22 = vector.load %arg4[%c0_13, %c0_14] : memref<128x128xbf16, #tpu.memory_space<vmem>>, vector<128x128xbf16>
      %cst_15 = arith.constant dense<0.000000e+00> : vector<128x128xf32>
      %23 = tpu.matmul %21, %22, %cst_15 {dimension_numbers = #tpu.dot_dimension_numbers<[1], [0], [0], [1], [0, 0, 1, 1], [], []>} : vector<128x128xbf16>, vector<128x128xbf16>, vector<128x128xf32> -> vector<128x128xf32>
      %c0_16 = arith.constant 0 : index
      %c0_17 = arith.constant 0 : index
      %24 = vector.load %arg5[%c0_16, %c0_17] : memref<128x128xbf16, #tpu.memory_space<vmem>>, vector<128x128xbf16>
      %cst_18 = arith.constant dense<0.000000e+00> : vector<128x128xf32>
      %25 = tpu.matmul %19, %24, %cst_18 {dimension_numbers = #tpu.dot_dimension_numbers<[1], [0], [0], [1], [0, 0, 1, 1], [], []>} : vector<128x128xbf16>, vector<128x128xbf16>, vector<128x128xf32> -> vector<128x128xf32>
      %26 = arith.addf %23, %25 : vector<128x128xf32>
      %c0_19 = arith.constant 0 : index
      %c0_20 = arith.constant 0 : index
      %27 = vector.load %arg6[%c0_19, %c0_20] : memref<1x128xf32, #tpu.memory_space<vmem>>, vector<1x128xf32>
      %28 = vector.broadcast %27 : vector<1x128xf32> to vector<128x128xf32>
      %29 = arith.addf %26, %28 : vector<128x128xf32>
      %30 = arith.truncf %29 : vector<128x128xf32> to vector<128x128xbf16>
      %c0_21 = arith.constant 0 : index
      %c0_22 = arith.constant 0 : index
      %31 = vector.load %arg7[%c0_21, %c0_22] : memref<128x128xbf16, #tpu.memory_space<vmem>>, vector<128x128xbf16>
      tpu.vector_store %arg7[%c0_21, %c0_22], %30 {strides = array<i32>} : memref<128x128xbf16, #tpu.memory_space<vmem>>, vector<128x128xbf16>,
    } else {
    }
    return
  }
  func.func @transform_0(%arg0: i32, %arg1: i32) -> (i32, i32) {
    %c0_i32 = arith.constant 0 : i32
    return %arg0, %arg1 : i32, i32
  }
  func.func @transform_1(%arg0: i32, %arg1: i32) -> (i32, i32) {
    %c0_i32 = arith.constant 0 : i32
    %c0_i32_0 = arith.constant 0 : i32
    %c0_i32_1 = arith.constant 0 : i32
    return %c0_i32, %c0_i32_0 : i32, i32
  }
  func.func @transform_2(%arg0: i32, %arg1: i32) -> (i32, i32) {
    %c0_i32 = arith.constant 0 : i32
    %c0_i32_0 = arith.constant 0 : i32
    %c0_i32_1 = arith.constant 0 : i32
    return %c0_i32, %c0_i32_0 : i32, i32
  }
  func.func @transform_3(%arg0: i32, %arg1: i32) -> (i32, i32) {
    %c0_i32 = arith.constant 0 : i32
    %c0_i32_0 = arith.constant 0 : i32
    %c0_i32_1 = arith.constant 0 : i32
    return %c0_i32, %c0_i32_0 : i32, i32
  }
  func.func @transform_4(%arg0: i32, %arg1: i32) -> (i32, i32) {
    %c0_i32 = arith.constant 0 : i32
    %c0_i32_0 = arith.constant 0 : i32
    %c0_i32_1 = arith.constant 0 : i32
    return %c0_i32, %c0_i32_0 : i32, i32
  }
  func.func @transform_5(%arg0: i32, %arg1: i32) -> (i32, i32) {
    %c0_i32 = arith.constant 0 : i32
    %c0_i32_0 = arith.constant 0 : i32
    return %arg0, %c0_i32 : i32, i32
  }
}

module attributes {stable_mosaic.version = 11 : i64} {
  func.func @_pool_lin_kernel(%arg0: i32, %arg1: memref<2x128xbf16, #tpu.memory_space<vmem>>, %arg2: memref<128x128xbf16, #tpu.memory_space<vmem>>, %arg3: memref<2x1xf32, #tpu.memory_space<vmem>>, %arg4: memref<128x128xbf16, #tpu.memory_space<vmem>>, %arg5: memref<1x128xf32, #tpu.memory_space<vmem>>, %arg6: memref<2x128xf32, #tpu.memory_space<vmem>>, %arg7: memref<2x128xf32, #tpu.memory_space<vmem>>) attributes {dimension_semantics = [#tpu.dimension_semantics<arbitrary>], iteration_bounds = array<i64: 1>, scalar_prefetch = 0 : i64, scratch_operands = 1 : i64, tpu.core_type = #tpu.core_type<tc>, window_params = [{transform_indices = @transform_0, window_bounds = array<i64: 2, 128>}, {transform_indices = @transform_1, window_bounds = array<i64: 128, 128>}, {pipeline_mode = #tpu.pipeline_mode<synchronous>, transform_indices = @transform_2, window_bounds = array<i64: 2, 1>}, {pipeline_mode = #tpu.pipeline_mode<synchronous>, transform_indices = @transform_3, window_bounds = array<i64: 128, 128>}, {pipeline_mode = #tpu.pipeline_mode<synchronous>, transform_indices = @transform_4, window_bounds = array<i64: 1, 128>}, {pipeline_mode = #tpu.pipeline_mode<synchronous>, transform_indices = @transform_5, window_bounds = array<i64: 2, 128>}]} {
    %c0_i32 = arith.constant 0 : i32
    %0 = arith.cmpi eq, %arg0, %c0_i32 : i32
    %1 = arith.extui %0 : i1 to i32
    %c0_i32_0 = arith.constant 0 : i32
    %2 = arith.cmpi ne, %1, %c0_i32_0 : i32
    scf.if %2 {
      %cst_10 = arith.constant 0.000000e+00 : f32
      %12 = vector.broadcast %cst_10 : f32 to vector<2x128xf32>
      %c0_11 = arith.constant 0 : index
      %c0_12 = arith.constant 0 : index
      %13 = vector.load %arg7[%c0_11, %c0_12] : memref<2x128xf32, #tpu.memory_space<vmem>>, vector<2x128xf32>
      tpu.vector_store %arg7[%c0_11, %c0_12], %12 {strides = array<i32>} : memref<2x128xf32, #tpu.memory_space<vmem>>, vector<2x128xf32>,
    } else {
    }
    %c0 = arith.constant 0 : index
    %c0_1 = arith.constant 0 : index
    %3 = vector.load %arg7[%c0, %c0_1] : memref<2x128xf32, #tpu.memory_space<vmem>>, vector<2x128xf32>
    %c0_2 = arith.constant 0 : index
    %c0_3 = arith.constant 0 : index
    %4 = vector.load %arg1[%c0_2, %c0_3] : memref<2x128xbf16, #tpu.memory_space<vmem>>, vector<2x128xbf16>
    %c0_4 = arith.constant 0 : index
    %c0_5 = arith.constant 0 : index
    %5 = vector.load %arg2[%c0_4, %c0_5] : memref<128x128xbf16, #tpu.memory_space<vmem>>, vector<128x128xbf16>
    %cst = arith.constant dense<0.000000e+00> : vector<2x128xf32>
    %6 = tpu.matmul %4, %5, %cst {dimension_numbers = #tpu.dot_dimension_numbers<[1], [0], [0], [1], [0, 0, 1, 1], [], []>} : vector<2x128xbf16>, vector<128x128xbf16>, vector<2x128xf32> -> vector<2x128xf32>
    %7 = arith.addf %3, %6 : vector<2x128xf32>
    %c0_6 = arith.constant 0 : index
    %c0_7 = arith.constant 0 : index
    %8 = vector.load %arg7[%c0_6, %c0_7] : memref<2x128xf32, #tpu.memory_space<vmem>>, vector<2x128xf32>
    tpu.vector_store %arg7[%c0_6, %c0_7], %7 {strides = array<i32>} : memref<2x128xf32, #tpu.memory_space<vmem>>, vector<2x128xf32>,
    %c0_i32_8 = arith.constant 0 : i32
    %9 = arith.cmpi eq, %arg0, %c0_i32_8 : i32
    %10 = arith.extui %9 : i1 to i32
    %c0_i32_9 = arith.constant 0 : i32
    %11 = arith.cmpi ne, %10, %c0_i32_9 : i32
    scf.if %11 {
      %c0_10 = arith.constant 0 : index
      %c0_11 = arith.constant 0 : index
      %12 = vector.load %arg7[%c0_10, %c0_11] : memref<2x128xf32, #tpu.memory_space<vmem>>, vector<2x128xf32>
      %c0_12 = arith.constant 0 : index
      %c0_13 = arith.constant 0 : index
      %13 = vector.load %arg3[%c0_12, %c0_13] : memref<2x1xf32, #tpu.memory_space<vmem>>, vector<2x1xf32>
      %14 = vector.broadcast %13 : vector<2x1xf32> to vector<2x128xf32>
      %15 = arith.divf %12, %14 : vector<2x128xf32>
      %16 = arith.truncf %15 : vector<2x128xf32> to vector<2x128xbf16>
      %c0_14 = arith.constant 0 : index
      %c0_15 = arith.constant 0 : index
      %17 = vector.load %arg4[%c0_14, %c0_15] : memref<128x128xbf16, #tpu.memory_space<vmem>>, vector<128x128xbf16>
      %cst_16 = arith.constant dense<0.000000e+00> : vector<2x128xf32>
      %18 = tpu.matmul %16, %17, %cst_16 {dimension_numbers = #tpu.dot_dimension_numbers<[1], [0], [0], [1], [0, 0, 1, 1], [], []>} : vector<2x128xbf16>, vector<128x128xbf16>, vector<2x128xf32> -> vector<2x128xf32>
      %c0_17 = arith.constant 0 : index
      %c0_18 = arith.constant 0 : index
      %19 = vector.load %arg5[%c0_17, %c0_18] : memref<1x128xf32, #tpu.memory_space<vmem>>, vector<1x128xf32>
      %20 = vector.broadcast %19 : vector<1x128xf32> to vector<2x128xf32>
      %21 = arith.addf %18, %20 : vector<2x128xf32>
      %c0_19 = arith.constant 0 : index
      %c0_20 = arith.constant 0 : index
      %22 = vector.load %arg6[%c0_19, %c0_20] : memref<2x128xf32, #tpu.memory_space<vmem>>, vector<2x128xf32>
      tpu.vector_store %arg6[%c0_19, %c0_20], %21 {strides = array<i32>} : memref<2x128xf32, #tpu.memory_space<vmem>>, vector<2x128xf32>,
    } else {
    }
    return
  }
  func.func @transform_0(%arg0: i32) -> (i32, i32) {
    %c0_i32 = arith.constant 0 : i32
    %c0_i32_0 = arith.constant 0 : i32
    return %c0_i32, %arg0 : i32, i32
  }
  func.func @transform_1(%arg0: i32) -> (i32, i32) {
    %c0_i32 = arith.constant 0 : i32
    %c0_i32_0 = arith.constant 0 : i32
    return %arg0, %c0_i32 : i32, i32
  }
  func.func @transform_2(%arg0: i32) -> (i32, i32) {
    %c0_i32 = arith.constant 0 : i32
    %c0_i32_0 = arith.constant 0 : i32
    %c0_i32_1 = arith.constant 0 : i32
    return %c0_i32, %c0_i32_0 : i32, i32
  }
  func.func @transform_3(%arg0: i32) -> (i32, i32) {
    %c0_i32 = arith.constant 0 : i32
    %c0_i32_0 = arith.constant 0 : i32
    %c0_i32_1 = arith.constant 0 : i32
    return %c0_i32, %c0_i32_0 : i32, i32
  }
  func.func @transform_4(%arg0: i32) -> (i32, i32) {
    %c0_i32 = arith.constant 0 : i32
    %c0_i32_0 = arith.constant 0 : i32
    %c0_i32_1 = arith.constant 0 : i32
    return %c0_i32, %c0_i32_0 : i32, i32
  }
  func.func @transform_5(%arg0: i32) -> (i32, i32) {
    %c0_i32 = arith.constant 0 : i32
    %c0_i32_0 = arith.constant 0 : i32
    %c0_i32_1 = arith.constant 0 : i32
    return %c0_i32, %c0_i32_0 : i32, i32
  }
}

</mosaic_0001>

<llo_original>
// kernel: vanilla_graph_conv_forward.7
$region0: #{vanilla_graph_conv_forward.7}
  #allocation0 [shape = 'u32[]', space=smem, size = 0x4, offset = 0x4, fixed_abs, tag = 'smem constant byte address 0x4 - core index']
  #allocation1 [shape = 'u32[144,128]{1,0:T(1,128)}', space=vmem, size = 0x12000, scoped, tag = 'internal scratch']
  #allocation2 [shape = 'f32[2,128]{1,0:T(2,128)}', space=vmem, size = 0x400, scoped, tag = 'scratch operand']
  %s0 = inlined_call_operand.vmem [shape: bf16[2,128], index: 0, kind: input, shape index: {}]
  %s1 = inlined_call_operand.vmem [shape: bf16[128,128], index: 1, kind: input, shape index: {}]
  %s2 = inlined_call_operand.vmem [shape: f32[2,1], index: 2, kind: input, shape index: {}]
  %s3 = inlined_call_operand.vmem [shape: bf16[128,128], index: 3, kind: input, shape index: {}]
  %s4 = inlined_call_operand.vmem [shape: f32[1,128], index: 4, kind: input, shape index: {}]
  %s5 = inlined_call_operand.hbm [shape: f32[2,128], index: 5, kind: output, shape index: {}]
  %s6 = sld [smem:[#allocation0]]
  $region38: #{vanilla_graph_conv_forward.7} parent=0
    _
  %s8 = ssub.s32 1, %s6
  %s9 = scalar_select 0, %s8, %s6
  $region1: #{vanilla_graph_conv_forward.7} parent=0
    #allocation3 [shape = 'u8[1024]{0}', space=vmem, size = 0x400, scoped, tag = 'output window, operand 0, single buffered']
    #allocation4 [shape = 's32[1]{0}', space=sflag, size = 0x4, scoped, tag = 'scoped memory for vanilla_graph_conv_forward.7']
    %10 = vsyncpa [#allocation4], 0
    // Predicated region
    $region2: #{vanilla_graph_conv_forward.7} parent=1 // pred_check
      _
    $region3: #{vanilla_graph_conv_forward.7} parent=1 // pred_check_branch
      %12 = sbr.rel (0) target = $region5
    $region4: #{vanilla_graph_conv_forward.7} parent=1 // pred_region
      _
    $region5: #{vanilla_graph_conv_forward.7} parent=1 // pred_fallthru
      _
    // Predicated region
    $region6: #{vanilla_graph_conv_forward.7} parent=1 // pred_check
      _
    $region7: #{vanilla_graph_conv_forward.7} parent=1 // pred_check_branch
      %14 = sbr.rel (0) target = $region9
    $region8: #{vanilla_graph_conv_forward.7} parent=1 // pred_region
      _
    $region9: #{vanilla_graph_conv_forward.7} parent=1 // pred_fallthru
      _
    // Predicated region
    $region10: #{vanilla_graph_conv_forward.7} parent=1 // pred_check
      _
    $region11: #{vanilla_graph_conv_forward.7} parent=1 // pred_check_branch
      %16 = sbr.rel (0) target = $region13
    $region12: #{vanilla_graph_conv_forward.7} parent=1 // pred_region
      _
    $region13: #{vanilla_graph_conv_forward.7} parent=1 // pred_fallthru
      _
    // Predicated region
    $region14: #{vanilla_graph_conv_forward.7} parent=1 // pred_check
      _
    $region15: #{vanilla_graph_conv_forward.7} parent=1 // pred_check_branch
      %18 = sbr.rel (0) target = $region17
    $region16: #{vanilla_graph_conv_forward.7} parent=1 // pred_region
      _
    $region17: #{vanilla_graph_conv_forward.7} parent=1 // pred_fallthru
      _
    // Predicated region
    $region18: #{vanilla_graph_conv_forward.7} parent=1 // pred_check
      _
    $region19: #{vanilla_graph_conv_forward.7} parent=1 // pred_check_branch
      %20 = sbr.rel (0) target = $region21
    $region20: #{vanilla_graph_conv_forward.7} parent=1 // pred_region
      _
    $region21: #{vanilla_graph_conv_forward.7} parent=1 // pred_fallthru
      _
    %p22 = scmp.eq.s32.totalorder 0, 0
    // Predicated region
    $region22: #{vanilla_graph_conv_forward.7} parent=1 // pred_check
      %p23 = pneg %p22
    $region23: #{vanilla_graph_conv_forward.7} parent=1 // pred_check_branch
      %25 = sbr.rel (%p23) target = $region25
    $region24: #{vanilla_graph_conv_forward.7} parent=1 // pred_region
      %26 = vst [vmem:[#allocation2] sm:$0x3] 0.0
    $region25: #{vanilla_graph_conv_forward.7} parent=1 // pred_fallthru
      _
    %v27 = vld [vmem:[#allocation2] sm:$0x3]
    %v28 = vld [vmem:[%s0] sm:$0x1]
    %v29 = vld [vmem:[%s1] sm:$0xf]
    %v30 = vld [vmem:[%s1 + $0x4] sm:$0xf]
    %v31 = vld [vmem:[%s1 + $0x8] sm:$0xf]
    %v32 = vld [vmem:[%s1 + $0xc] sm:$0xf]
    %v33 = vld [vmem:[%s1 + $0x10] sm:$0xf]
    %v34 = vld [vmem:[%s1 + $0x14] sm:$0xf]
    %v35 = vld [vmem:[%s1 + $0x18] sm:$0xf]
    %v36 = vld [vmem:[%s1 + $0x1c] sm:$0xf]
    %v37 = vld [vmem:[%s1 + $0x20] sm:$0xf]
    %v38 = vld [vmem:[%s1 + $0x24] sm:$0xf]
    %v39 = vld [vmem:[%s1 + $0x28] sm:$0xf]
    %v40 = vld [vmem:[%s1 + $0x2c] sm:$0xf]
    %v41 = vld [vmem:[%s1 + $0x30] sm:$0xf]
    %v42 = vld [vmem:[%s1 + $0x34] sm:$0xf]
    %v43 = vld [vmem:[%s1 + $0x38] sm:$0xf]
    %v44 = vld [vmem:[%s1 + $0x3c] sm:$0xf]
    %v61 = vunpack.c.l.b16 %v29
    %v62 = vunpack.c.l.b16 %v30
    %v63 = vunpack.c.l.b16 %v31
    %v64 = vunpack.c.l.b16 %v32
    %v65 = vunpack.c.l.b16 %v33
    %v66 = vunpack.c.l.b16 %v34
    %v67 = vunpack.c.l.b16 %v35
    %v68 = vunpack.c.l.b16 %v36
    %v69 = vunpack.c.l.b16 %v37
    %v70 = vunpack.c.l.b16 %v38
    %v71 = vunpack.c.l.b16 %v39
    %v72 = vunpack.c.l.b16 %v40
    %v73 = vunpack.c.l.b16 %v41
    %v74 = vunpack.c.l.b16 %v42
    %v75 = vunpack.c.l.b16 %v43
    %v76 = vunpack.c.l.b16 %v44
    %v77 = vpack.c.b16 %v62, %v61
    %v78 = vpack.c.b16 %v64, %v63
    %v79 = vpack.c.b16 %v66, %v65
    %v80 = vpack.c.b16 %v68, %v67
    %v81 = vpack.c.b16 %v70, %v69
    %v82 = vpack.c.b16 %v72, %v71
    %v83 = vpack.c.b16 %v74, %v73
    %v84 = vpack.c.b16 %v76, %v75
    %93 = vmatprep.subr.bf16.mxu0 0
    %94 = vmatpush1.bf16.msra.mxu0 %v77
    %95 = vmatprep.subr.bf16.mxu0 0
    %96 = vmatpush1.bf16.msra.mxu0 %v78
    %97 = vmatprep.subr.bf16.mxu0 0
    %98 = vmatpush1.bf16.msra.mxu0 %v79
    %99 = vmatprep.subr.bf16.mxu0 0
    %100 = vmatpush1.bf16.msra.mxu0 %v80
    %101 = vmatprep.subr.bf16.mxu0 0
    %102 = vmatpush1.bf16.msra.mxu0 %v81
    %103 = vmatprep.subr.bf16.mxu0 0
    %104 = vmatpush1.bf16.msra.mxu0 %v82
    %105 = vmatprep.subr.bf16.mxu0 0
    %106 = vmatpush1.bf16.msra.mxu0 %v83
    %107 = vmatprep.subr.bf16.mxu0 0
    %108 = vmatpush1.bf16.msra.mxu0 %v84
    %109 = vmatprep.subr.bf16.mxu0 0
    %110 = vmatpush1.bf16.msra.mxu0 0
    %111 = vmatprep.subr.bf16.mxu0 0
    %112 = vmatpush1.bf16.msra.mxu0 0
    %113 = vmatprep.subr.bf16.mxu0 0
    %114 = vmatpush1.bf16.msra.mxu0 0
    %115 = vmatprep.subr.bf16.mxu0 0
    %116 = vmatpush1.bf16.msra.mxu0 0
    %117 = vmatprep.subr.bf16.mxu0 0
    %118 = vmatpush1.bf16.msra.mxu0 0
    %119 = vmatprep.subr.bf16.mxu0 0
    %120 = vmatpush1.bf16.msra.mxu0 0
    %121 = vmatprep.subr.bf16.mxu0 0
    %122 = vmatpush1.bf16.msra.mxu0 0
    %123 = vmatprep.subr.bf16.mxu0 0
    %124 = vmatpush1.bf16.msra.mxu0 0
    %125 = vmatprep.mubr.bf16.mxu0 0
    %126 = vmatmul.mubr.bf16.gmra.mrb[0].mxu0 %v28
    %v127 = vpop.f32.mrb[0].mxu0
    %v128 = vadd.f32 0.0, %v127
    %v129 = vpop.f32.mrb[0].mxu0
    %v130 = vpop.f32.mrb[0].mxu0
    %v131 = vpop.f32.mrb[0].mxu0
    %132 = vdwg.mxu0
    %v133 = vadd.f32 %v27, %v128
    %134 = vst [vmem:[#allocation2] sm:$0x3] %v133
    // Predicated region
    $region26: #{vanilla_graph_conv_forward.7} parent=1 // pred_check
      %p135 = pneg %p22
    $region27: #{vanilla_graph_conv_forward.7} parent=1 // pred_check_branch
      %137 = sbr.rel (%p135) target = $region29
    $region28: #{vanilla_graph_conv_forward.7} parent=1 // pred_region
      %v138 = vld [vmem:[#allocation2] sm:$0x3]
      %v139 = vld [vmem:[%s2] sm:$0x3]
      %141 = vset.pattern.permute.xlu0 0
      %142 = vperm.xlu0 %141, %v139
      %v143 = vpop.permute.xlu0 %142
      %v145 = vrcp.pop %v143
      %v146 = vmul.f32 %v138, %v145
      %v147 = vpack.c.bf16 %v146, %v146
      %v148 = vld [vmem:[%s3] sm:$0xf]
      %v149 = vld [vmem:[%s3 + $0x4] sm:$0xf]
      %v150 = vld [vmem:[%s3 + $0x8] sm:$0xf]
      %v151 = vld [vmem:[%s3 + $0xc] sm:$0xf]
      %v152 = vld [vmem:[%s3 + $0x10] sm:$0xf]
      %v153 = vld [vmem:[%s3 + $0x14] sm:$0xf]
      %v154 = vld [vmem:[%s3 + $0x18] sm:$0xf]
      %v155 = vld [vmem:[%s3 + $0x1c] sm:$0xf]
      %v156 = vld [vmem:[%s3 + $0x20] sm:$0xf]
      %v157 = vld [vmem:[%s3 + $0x24] sm:$0xf]
      %v158 = vld [vmem:[%s3 + $0x28] sm:$0xf]
      %v159 = vld [vmem:[%s3 + $0x2c] sm:$0xf]
      %v160 = vld [vmem:[%s3 + $0x30] sm:$0xf]
      %v161 = vld [vmem:[%s3 + $0x34] sm:$0xf]
      %v162 = vld [vmem:[%s3 + $0x38] sm:$0xf]
      %v163 = vld [vmem:[%s3 + $0x3c] sm:$0xf]
      %v164 = vld [vmem:[%s4] sm:$0x1]
      %v166 = vlaneseq
      %v167 = vshrl.u32 %v166, 7
      %v168 = vsub.s32 0, %v167
      %v169 = vrot.slane %v164, %v168
      %v187 = vunpack.c.l.b16 %v148
      %v188 = vunpack.c.l.b16 %v149
      %v189 = vunpack.c.l.b16 %v150
      %v190 = vunpack.c.l.b16 %v151
      %v191 = vunpack.c.l.b16 %v152
      %v192 = vunpack.c.l.b16 %v153
      %v193 = vunpack.c.l.b16 %v154
      %v194 = vunpack.c.l.b16 %v155
      %v195 = vunpack.c.l.b16 %v156
      %v196 = vunpack.c.l.b16 %v157
      %v197 = vunpack.c.l.b16 %v158
      %v198 = vunpack.c.l.b16 %v159
      %v199 = vunpack.c.l.b16 %v160
      %v200 = vunpack.c.l.b16 %v161
      %v201 = vunpack.c.l.b16 %v162
      %v202 = vunpack.c.l.b16 %v163
      %v203 = vpack.c.b16 %v188, %v187
      %v204 = vpack.c.b16 %v190, %v189
      %v205 = vpack.c.b16 %v192, %v191
      %v206 = vpack.c.b16 %v194, %v193
      %v207 = vpack.c.b16 %v196, %v195
      %v208 = vpack.c.b16 %v198, %v197
      %v209 = vpack.c.b16 %v200, %v199
      %v210 = vpack.c.b16 %v202, %v201
      %219 = vmatprep.subr.bf16.mxu0 0
      %220 = vmatpush1.bf16.msra.mxu0 %v203
      %221 = vmatprep.subr.bf16.mxu0 0
      %222 = vmatpush1.bf16.msra.mxu0 %v204
      %223 = vmatprep.subr.bf16.mxu0 0
      %224 = vmatpush1.bf16.msra.mxu0 %v205
      %225 = vmatprep.subr.bf16.mxu0 0
      %226 = vmatpush1.bf16.msra.mxu0 %v206
      %227 = vmatprep.subr.bf16.mxu0 0
      %228 = vmatpush1.bf16.msra.mxu0 %v207
      %229 = vmatprep.subr.bf16.mxu0 0
      %230 = vmatpush1.bf16.msra.mxu0 %v208
      %231 = vmatprep.subr.bf16.mxu0 0
      %232 = vmatpush1.bf16.msra.mxu0 %v209
      %233 = vmatprep.subr.bf16.mxu0 0
      %234 = vmatpush1.bf16.msra.mxu0 %v210
      %235 = vmatprep.subr.bf16.mxu0 0
      %236 = vmatpush1.bf16.msra.mxu0 0
      %237 = vmatprep.subr.bf16.mxu0 0
      %238 = vmatpush1.bf16.msra.mxu0 0
      %239 = vmatprep.subr.bf16.mxu0 0
      %240 = vmatpush1.bf16.msra.mxu0 0
      %241 = vmatprep.subr.bf16.mxu0 0
      %242 = vmatpush1.bf16.msra.mxu0 0
      %243 = vmatprep.subr.bf16.mxu0 0
      %244 = vmatpush1.bf16.msra.mxu0 0
      %245 = vmatprep.subr.bf16.mxu0 0
      %246 = vmatpush1.bf16.msra.mxu0 0
      %247 = vmatprep.subr.bf16.mxu0 0
      %248 = vmatpush1.bf16.msra.mxu0 0
      %249 = vmatprep.subr.bf16.mxu0 0
      %250 = vmatpush1.bf16.msra.mxu0 0
      %251 = vmatprep.mubr.bf16.mxu0 0
      %252 = vmatmul.mubr.bf16.gmra.mrb[0].mxu0 %v147
      %v253 = vpop.f32.mrb[0].mxu0
      %v254 = vadd.f32 %v169, %v253
      %v255 = vpop.f32.mrb[0].mxu0
      %v256 = vpop.f32.mrb[0].mxu0
      %v257 = vpop.f32.mrb[0].mxu0
      %258 = vdwg.mxu0
      %259 = vst [vmem:[#allocation3] sm:$0x3] %v254
    $region29: #{vanilla_graph_conv_forward.7} parent=1 // pred_fallthru
      _
    // Predicated region
    $region30: #{vanilla_graph_conv_forward.7} parent=1 // pred_check
      _
    $region31: #{vanilla_graph_conv_forward.7} parent=1 // pred_check_branch
      %261 = sbr.rel (0) target = $region33
    $region32: #{vanilla_graph_conv_forward.7} parent=1 // pred_region
      %s263 = ssub.s32 32, 32
      %264 = vsyncadd [#allocation4], %s263
      %s266 = sshll.u32 [#allocation3], 4
      %s267 = int_to_ptr.vmem [resolvable:$true] %s266
      %269 = dma.vmem_to_hbm [thread:$0]  %s267, 32, %s5, [#allocation4]
    $region33: #{vanilla_graph_conv_forward.7} parent=1 // pred_fallthru
      _
    // Predicated region
    $region34: #{vanilla_graph_conv_forward.7} parent=1 // pred_check
      _
    $region35: #{vanilla_graph_conv_forward.7} parent=1 // pred_check_branch
      %271 = sbr.rel (0) target = $region37
    $region36: #{vanilla_graph_conv_forward.7} parent=1 // pred_region
      %272 = dma.done [#allocation4], 32
    $region37: #{vanilla_graph_conv_forward.7} parent=1 // pred_fallthru
      _
    %273 = vsyncpa [#allocation4], 1

// kernel: vanilla_graph_conv_forward.6
$region0: #{vanilla_graph_conv_forward.6}
  #allocation0 [shape = 'u32[]', space=smem, size = 0x4, offset = 0x4, fixed_abs, tag = 'smem constant byte address 0x4 - core index']
  #allocation1 [shape = 'u32[144,128]{1,0:T(1,128)}', space=vmem, size = 0x12000, scoped, tag = 'internal scratch']
  #allocation2 [shape = 'f32[128,128]{1,0:T(8,128)}', space=vmem, size = 0x10000, scoped, tag = 'scratch operand']
  %s0 = inlined_call_operand.vmem [shape: s8[128,128], index: 0, kind: input, shape index: {}]
  %s1 = inlined_call_operand.vmem [shape: bf16[128,128], index: 1, kind: input, shape index: {}]
  %s2 = inlined_call_operand.vmem [shape: bf16[128,128], index: 2, kind: input, shape index: {}]
  %s3 = inlined_call_operand.vmem [shape: bf16[128,128], index: 3, kind: input, shape index: {}]
  %s4 = inlined_call_operand.vmem [shape: f32[1,128], index: 4, kind: input, shape index: {}]
  %s5 = inlined_call_operand.vmem [shape: bf16[128,128], index: 5, kind: output, shape index: {}]
  %s6 = sld [smem:[#allocation0]]
  $region38: #{vanilla_graph_conv_forward.6} parent=0
    _
  %s8 = ssub.s32 1, %s6
  %s9 = scalar_select 0, %s8, %s6
  // Predicated region
  $region2: #{vanilla_graph_conv_forward.6} parent=0 // pred_check
    _
  $region3: #{vanilla_graph_conv_forward.6} parent=0 // pred_check_branch
    %11 = sbr.rel (0) target = $region5
  $region4: #{vanilla_graph_conv_forward.6} parent=0 // pred_region
    _
  $region5: #{vanilla_graph_conv_forward.6} parent=0 // pred_fallthru
    _
  // Predicated region
  $region6: #{vanilla_graph_conv_forward.6} parent=0 // pred_check
    _
  $region7: #{vanilla_graph_conv_forward.6} parent=0 // pred_check_branch
    %13 = sbr.rel (0) target = $region9
  $region8: #{vanilla_graph_conv_forward.6} parent=0 // pred_region
    _
  $region9: #{vanilla_graph_conv_forward.6} parent=0 // pred_fallthru
    _
  // Predicated region
  $region10: #{vanilla_graph_conv_forward.6} parent=0 // pred_check
    _
  $region11: #{vanilla_graph_conv_forward.6} parent=0 // pred_check_branch
    %15 = sbr.rel (0) target = $region13
  $region12: #{vanilla_graph_conv_forward.6} parent=0 // pred_region
    _
  $region13: #{vanilla_graph_conv_forward.6} parent=0 // pred_fallthru
    _
  // Predicated region
  $region14: #{vanilla_graph_conv_forward.6} parent=0 // pred_check
    _
  $region15: #{vanilla_graph_conv_forward.6} parent=0 // pred_check_branch
    %17 = sbr.rel (0) target = $region17
  $region16: #{vanilla_graph_conv_forward.6} parent=0 // pred_region
    _
  $region17: #{vanilla_graph_conv_forward.6} parent=0 // pred_fallthru
    _
  // Predicated region
  $region18: #{vanilla_graph_conv_forward.6} parent=0 // pred_check
    _
  $region19: #{vanilla_graph_conv_forward.6} parent=0 // pred_check_branch
    %19 = sbr.rel (0) target = $region21
  $region20: #{vanilla_graph_conv_forward.6} parent=0 // pred_region
    _
  $region21: #{vanilla_graph_conv_forward.6} parent=0 // pred_fallthru
    _
  %p21 = scmp.eq.s32.totalorder 0, 0
  // Predicated region
  $region22: #{vanilla_graph_conv_forward.6} parent=0 // pred_check
    %p22 = pneg %p21
  $region23: #{vanilla_graph_conv_forward.6} parent=0 // pred_check_branch
    %24 = sbr.rel (%p22) target = $region25
  $region24: #{vanilla_graph_conv_forward.6} parent=0 // pred_region
    %25 = vst [vmem:[#allocation2] sm:$0xff] 0.0
    %26 = vst [vmem:[#allocation2 + $0x8] sm:$0xff] 0.0
    %27 = vst [vmem:[#allocation2 + $0x10] sm:$0xff] 0.0
    %28 = vst [vmem:[#allocation2 + $0x18] sm:$0xff] 0.0
    %29 = vst [vmem:[#allocation2 + $0x20] sm:$0xff] 0.0
    %30 = vst [vmem:[#allocation2 + $0x28] sm:$0xff] 0.0
    %31 = vst [vmem:[#allocation2 + $0x30] sm:$0xff] 0.0
    %32 = vst [vmem:[#allocation2 + $0x38] sm:$0xff] 0.0
    %33 = vst [vmem:[#allocation2 + $0x40] sm:$0xff] 0.0
    %34 = vst [vmem:[#allocation2 + $0x48] sm:$0xff] 0.0
    %35 = vst [vmem:[#allocation2 + $0x50] sm:$0xff] 0.0
    %36 = vst [vmem:[#allocation2 + $0x58] sm:$0xff] 0.0
    %37 = vst [vmem:[#allocation2 + $0x60] sm:$0xff] 0.0
    %38 = vst [vmem:[#allocation2 + $0x68] sm:$0xff] 0.0
    %39 = vst [vmem:[#allocation2 + $0x70] sm:$0xff] 0.0
    %40 = vst [vmem:[#allocation2 + $0x78] sm:$0xff] 0.0
  $region25: #{vanilla_graph_conv_forward.6} parent=0 // pred_fallthru
    _
  %v41 = vld [vmem:[%s0] sm:$0x3]
  %v42 = vld [vmem:[%s0 + $0x2] sm:$0x3]
  %v43 = vld [vmem:[%s0 + $0x4] sm:$0x3]
  %v44 = vld [vmem:[%s0 + $0x6] sm:$0x3]
  %v45 = vld [vmem:[%s0 + $0x8] sm:$0x3]
  %v46 = vld [vmem:[%s0 + $0xa] sm:$0x3]
  %v47 = vld [vmem:[%s0 + $0xc] sm:$0x3]
  %v48 = vld [vmem:[%s0 + $0xe] sm:$0x3]
  %v49 = vld [vmem:[%s0 + $0x10] sm:$0x3]
  %v50 = vld [vmem:[%s0 + $0x12] sm:$0x3]
  %v51 = vld [vmem:[%s0 + $0x14] sm:$0x3]
  %v52 = vld [vmem:[%s0 + $0x16] sm:$0x3]
  %v53 = vld [vmem:[%s0 + $0x18] sm:$0x3]
  %v54 = vld [vmem:[%s0 + $0x1a] sm:$0x3]
  %v55 = vld [vmem:[%s0 + $0x1c] sm:$0x3]
  %v56 = vld [vmem:[%s0 + $0x1e] sm:$0x3]
  %v57 = vunpack.c.l.s8.bf16 %v41
  %v58 = vunpack.c.l.s8.bf16 %v42
  %v59 = vunpack.c.l.s8.bf16 %v43
  %v60 = vunpack.c.l.s8.bf16 %v44
  %v61 = vunpack.c.l.s8.bf16 %v45
  %v62 = vunpack.c.l.s8.bf16 %v46
  %v63 = vunpack.c.l.s8.bf16 %v47
  %v64 = vunpack.c.l.s8.bf16 %v48
  %v65 = vunpack.c.l.s8.bf16 %v49
  %v66 = vunpack.c.l.s8.bf16 %v50
  %v67 = vunpack.c.l.s8.bf16 %v51
  %v68 = vunpack.c.l.s8.bf16 %v52
  %v69 = vunpack.c.l.s8.bf16 %v53
  %v70 = vunpack.c.l.s8.bf16 %v54
  %v71 = vunpack.c.l.s8.bf16 %v55
  %v72 = vunpack.c.l.s8.bf16 %v56
  %s73 = smul.u32 0, 128
  %s74 = sshra.s32 %s73, 3
  %s75 = sand.u32 %s73, 7
  %s76 = smul.addr %s74, 4
  %s77 = scalar_lea.vmem %s1, %s76
  %v78 = vld [vmem:[%s77] sm:$0xf]
  %v79 = vld [vmem:[%s77 + $0x4] sm:$0xf]
  %v80 = vld [vmem:[%s77 + $0x8] sm:$0xf]
  %v81 = vld [vmem:[%s77 + $0xc] sm:$0xf]
  %v82 = vld [vmem:[%s77 + $0x10] sm:$0xf]
  %v83 = vld [vmem:[%s77 + $0x14] sm:$0xf]
  %v84 = vld [vmem:[%s77 + $0x18] sm:$0xf]
  %v85 = vld [vmem:[%s77 + $0x1c] sm:$0xf]
  %v86 = vld [vmem:[%s77 + $0x20] sm:$0xf]
  %v87 = vld [vmem:[%s77 + $0x24] sm:$0xf]
  %v88 = vld [vmem:[%s77 + $0x28] sm:$0xf]
  %v89 = vld [vmem:[%s77 + $0x2c] sm:$0xf]
  %v90 = vld [vmem:[%s77 + $0x30] sm:$0xf]
  %v91 = vld [vmem:[%s77 + $0x34] sm:$0xf]
  %v92 = vld [vmem:[%s77 + $0x38] sm:$0xf]
  %v93 = vld [vmem:[%s77 + $0x3c] sm:$0xf]
  %v94 = vld [vmem:[#allocation2] sm:$0xff]
  %v95 = vld [vmem:[#allocation2 + $0x8] sm:$0xff]
  %v96 = vld [vmem:[#allocation2 + $0x10] sm:$0xff]
  %v97 = vld [vmem:[#allocation2 + $0x18] sm:$0xff]
  %v98 = vld [vmem:[#allocation2 + $0x20] sm:$0xff]
  %v99 = vld [vmem:[#allocation2 + $0x28] sm:$0xff]
  %v100 = vld [vmem:[#allocation2 + $0x30] sm:$0xff]
  %v101 = vld [vmem:[#allocation2 + $0x38] sm:$0xff]
  %v102 = vld [vmem:[#allocation2 + $0x40] sm:$0xff]
  %v103 = vld [vmem:[#allocation2 + $0x48] sm:$0xff]
  %v104 = vld [vmem:[#allocation2 + $0x50] sm:$0xff]
  %v105 = vld [vmem:[#allocation2 + $0x58] sm:$0xff]
  %v106 = vld [vmem:[#allocation2 + $0x60] sm:$0xff]
  %v107 = vld [vmem:[#allocation2 + $0x68] sm:$0xff]
  %v108 = vld [vmem:[#allocation2 + $0x70] sm:$0xff]
  %v109 = vld [vmem:[#allocation2 + $0x78] sm:$0xff]
  %v126 = vunpack.c.l.b16 %v57
  %v127 = vunpack.c.l.b16 %v58
  %v128 = vunpack.c.l.b16 %v59
  %v129 = vunpack.c.l.b16 %v60
  %v130 = vunpack.c.l.b16 %v61
  %v131 = vunpack.c.l.b16 %v62
  %v132 = vunpack.c.l.b16 %v63
  %v133 = vunpack.c.l.b16 %v64
  %v134 = vunpack.c.l.b16 %v65
  %v135 = vunpack.c.l.b16 %v66
  %v136 = vunpack.c.l.b16 %v67
  %v137 = vunpack.c.l.b16 %v68
  %v138 = vunpack.c.l.b16 %v69
  %v139 = vunpack.c.l.b16 %v70
  %v140 = vunpack.c.l.b16 %v71
  %v141 = vunpack.c.l.b16 %v72
  %v142 = vpack.c.b16 %v127, %v126
  %v143 = vpack.c.b16 %v129, %v128
  %v144 = vpack.c.b16 %v131, %v130
  %v145 = vpack.c.b16 %v133, %v132
  %v146 = vpack.c.b16 %v135, %v134
  %v147 = vpack.c.b16 %v137, %v136
  %v148 = vpack.c.b16 %v139, %v138
  %v149 = vpack.c.b16 %v141, %v140
  %v174 = vunpack.c.l.b16 %v78
  %v175 = vunpack.c.l.b16 %v79
  %v176 = vunpack.c.l.b16 %v80
  %v177 = vunpack.c.l.b16 %v81
  %v178 = vunpack.c.l.b16 %v82
  %v179 = vunpack.c.l.b16 %v83
  %v180 = vunpack.c.l.b16 %v84
  %v181 = vunpack.c.l.b16 %v85
  %v182 = vunpack.c.l.b16 %v86
  %v183 = vunpack.c.l.b16 %v87
  %v184 = vunpack.c.l.b16 %v88
  %v185 = vunpack.c.l.b16 %v89
  %v186 = vunpack.c.l.b16 %v90
  %v187 = vunpack.c.l.b16 %v91
  %v188 = vunpack.c.l.b16 %v92
  %v189 = vunpack.c.l.b16 %v93
  %v190 = vpack.c.b16 %v175, %v174
  %v191 = vpack.c.b16 %v177, %v176
  %v192 = vpack.c.b16 %v179, %v178
  %v193 = vpack.c.b16 %v181, %v180
  %v194 = vpack.c.b16 %v183, %v182
  %v195 = vpack.c.b16 %v185, %v184
  %v196 = vpack.c.b16 %v187, %v186
  %v197 = vpack.c.b16 %v189, %v188
  %206 = vmatprep.subr.bf16.mxu0 0
  %207 = vmatpush1.bf16.msra.mxu0 %v190
  %208 = vmatprep.subr.bf16.mxu0 0
  %209 = vmatpush1.bf16.msra.mxu0 %v191
  %210 = vmatprep.subr.bf16.mxu0 0
  %211 = vmatpush1.bf16.msra.mxu0 %v192
  %212 = vmatprep.subr.bf16.mxu0 0
  %213 = vmatpush1.bf16.msra.mxu0 %v193
  %214 = vmatprep.subr.bf16.mxu0 0
  %215 = vmatpush1.bf16.msra.mxu0 %v194
  %216 = vmatprep.subr.bf16.mxu0 0
  %217 = vmatpush1.bf16.msra.mxu0 %v195
  %218 = vmatprep.subr.bf16.mxu0 0
  %219 = vmatpush1.bf16.msra.mxu0 %v196
  %220 = vmatprep.subr.bf16.mxu0 0
  %221 = vmatpush1.bf16.msra.mxu0 %v197
  %222 = vmatprep.subr.bf16.mxu0 0
  %223 = vmatpush1.bf16.msra.mxu0 0
  %224 = vmatprep.subr.bf16.mxu0 0
  %225 = vmatpush1.bf16.msra.mxu0 0
  %226 = vmatprep.subr.bf16.mxu0 0
  %227 = vmatpush1.bf16.msra.mxu0 0
  %228 = vmatprep.subr.bf16.mxu0 0
  %229 = vmatpush1.bf16.msra.mxu0 0
  %230 = vmatprep.subr.bf16.mxu0 0
  %231 = vmatpush1.bf16.msra.mxu0 0
  %232 = vmatprep.subr.bf16.mxu0 0
  %233 = vmatpush1.bf16.msra.mxu0 0
  %234 = vmatprep.subr.bf16.mxu0 0
  %235 = vmatpush1.bf16.msra.mxu0 0
  %236 = vmatprep.subr.bf16.mxu0 0
  %237 = vmatpush1.bf16.msra.mxu0 0
  %238 = vmatprep.mubr.bf16.mxu0 0
  %239 = vmatmul.mubr.bf16.gmra.mrb[0].mxu0 %v142
  %v240 = vpop.f32.mrb[0].mxu0
  %v241 = vadd.f32 0.0, %v240
  %v242 = vpop.f32.mrb[0].mxu0
  %v243 = vpop.f32.mrb[0].mxu0
  %v244 = vadd.f32 0.0, %v243
  %v245 = vpop.f32.mrb[0].mxu0
  %246 = vmatprep.mubr.bf16.mxu0 0
  %247 = vmatmul.mubr.bf16.gmra.mrb[0].mxu0 %v143
  %v248 = vpop.f32.mrb[0].mxu0
  %v249 = vadd.f32 0.0, %v248
  %v250 = vpop.f32.mrb[0].mxu0
  %v251 = vpop.f32.mrb[0].mxu0
  %v252 = vadd.f32 0.0, %v251
  %v253 = vpop.f32.mrb[0].mxu0
  %254 = vmatprep.mubr.bf16.mxu0 0
  %255 = vmatmul.mubr.bf16.gmra.mrb[0].mxu0 %v144
  %v256 = vpop.f32.mrb[0].mxu0
  %v257 = vadd.f32 0.0, %v256
  %v258 = vpop.f32.mrb[0].mxu0
  %v259 = vpop.f32.mrb[0].mxu0
  %v260 = vadd.f32 0.0, %v259
  %v261 = vpop.f32.mrb[0].mxu0
  %262 = vmatprep.mubr.bf16.mxu0 0
  %263 = vmatmul.mubr.bf16.gmra.mrb[0].mxu0 %v145
  %v264 = vpop.f32.mrb[0].mxu0
  %v265 = vadd.f32 0.0, %v264
  %v266 = vpop.f32.mrb[0].mxu0
  %v267 = vpop.f32.mrb[0].mxu0
  %v268 = vadd.f32 0.0, %v267
  %v269 = vpop.f32.mrb[0].mxu0
  %270 = vmatprep.mubr.bf16.mxu0 0
  %271 = vmatmul.mubr.bf16.gmra.mrb[0].mxu0 %v146
  %v272 = vpop.f32.mrb[0].mxu0
  %v273 = vadd.f32 0.0, %v272
  %v274 = vpop.f32.mrb[0].mxu0
  %v275 = vpop.f32.mrb[0].mxu0
  %v276 = vadd.f32 0.0, %v275
  %v277 = vpop.f32.mrb[0].mxu0
  %278 = vmatprep.mubr.bf16.mxu0 0
  %279 = vmatmul.mubr.bf16.gmra.mrb[0].mxu0 %v147
  %v280 = vpop.f32.mrb[0].mxu0
  %v281 = vadd.f32 0.0, %v280
  %v282 = vpop.f32.mrb[0].mxu0
  %v283 = vpop.f32.mrb[0].mxu0
  %v284 = vadd.f32 0.0, %v283
  %v285 = vpop.f32.mrb[0].mxu0
  %286 = vmatprep.mubr.bf16.mxu0 0
  %287 = vmatmul.mubr.bf16.gmra.mrb[0].mxu0 %v148
  %v288 = vpop.f32.mrb[0].mxu0
  %v289 = vadd.f32 0.0, %v288
  %v290 = vpop.f32.mrb[0].mxu0
  %v291 = vpop.f32.mrb[0].mxu0
  %v292 = vadd.f32 0.0, %v291
  %v293 = vpop.f32.mrb[0].mxu0
  %294 = vmatprep.mubr.bf16.mxu0 0
  %295 = vmatmul.mubr.bf16.gmra.mrb[0].mxu0 %v149
  %v296 = vpop.f32.mrb[0].mxu0
  %v297 = vadd.f32 0.0, %v296
  %v298 = vpop.f32.mrb[0].mxu0
  %v299 = vpop.f32.mrb[0].mxu0
  %v300 = vadd.f32 0.0, %v299
  %v301 = vpop.f32.mrb[0].mxu0
  %302 = vdwg.mxu0
  %v303 = vadd.f32 %v94, %v241
  %v304 = vadd.f32 %v95, %v244
  %v305 = vadd.f32 %v96, %v249
  %v306 = vadd.f32 %v97, %v252
  %v307 = vadd.f32 %v98, %v257
  %v308 = vadd.f32 %v99, %v260
  %v309 = vadd.f32 %v100, %v265
  %v310 = vadd.f32 %v101, %v268
  %v311 = vadd.f32 %v102, %v273
  %v312 = vadd.f32 %v103, %v276
  %v313 = vadd.f32 %v104, %v281
  %v314 = vadd.f32 %v105, %v284
  %v315 = vadd.f32 %v106, %v289
  %v316 = vadd.f32 %v107, %v292
  %v317 = vadd.f32 %v108, %v297
  %v318 = vadd.f32 %v109, %v300
  %319 = vst [vmem:[#allocation2] sm:$0xff] %v303
  %320 = vst [vmem:[#allocation2 + $0x8] sm:$0xff] %v304
  %321 = vst [vmem:[#allocation2 + $0x10] sm:$0xff] %v305
  %322 = vst [vmem:[#allocation2 + $0x18] sm:$0xff] %v306
  %323 = vst [vmem:[#allocation2 + $0x20] sm:$0xff] %v307
  %324 = vst [vmem:[#allocation2 + $0x28] sm:$0xff] %v308
  %325 = vst [vmem:[#allocation2 + $0x30] sm:$0xff] %v309
  %326 = vst [vmem:[#allocation2 + $0x38] sm:$0xff] %v310
  %327 = vst [vmem:[#allocation2 + $0x40] sm:$0xff] %v311
  %328 = vst [vmem:[#allocation2 + $0x48] sm:$0xff] %v312
  %329 = vst [vmem:[#allocation2 + $0x50] sm:$0xff] %v313
  %330 = vst [vmem:[#allocation2 + $0x58] sm:$0xff] %v314
  %331 = vst [vmem:[#allocation2 + $0x60] sm:$0xff] %v315
  %332 = vst [vmem:[#allocation2 + $0x68] sm:$0xff] %v316
  %333 = vst [vmem:[#allocation2 + $0x70] sm:$0xff] %v317
  %334 = vst [vmem:[#allocation2 + $0x78] sm:$0xff] %v318
  // Predicated region
  $region26: #{vanilla_graph_conv_forward.6} parent=0 // pred_check
    %p335 = pneg %p21
  $region27: #{vanilla_graph_conv_forward.6} parent=0 // pred_check_branch
    %337 = sbr.rel (%p335) target = $region29
  $region28: #{vanilla_graph_conv_forward.6} parent=0 // pred_region
    %s338 = smul.u32 0, 128
    %s339 = sshra.s32 %s338, 3
    %s340 = sand.u32 %s338, 7
    %s341 = smul.addr %s339, 4
    %s342 = scalar_lea.vmem %s1, %s341
    %v343 = vld [vmem:[%s342] sm:$0xf]
    %v344 = vld [vmem:[%s342 + $0x4] sm:$0xf]
    %v345 = vld [vmem:[%s342 + $0x8] sm:$0xf]
    %v346 = vld [vmem:[%s342 + $0xc] sm:$0xf]
    %v347 = vld [vmem:[%s342 + $0x10] sm:$0xf]
    %v348 = vld [vmem:[%s342 + $0x14] sm:$0xf]
    %v349 = vld [vmem:[%s342 + $0x18] sm:$0xf]
    %v350 = vld [vmem:[%s342 + $0x1c] sm:$0xf]
    %v351 = vld [vmem:[%s342 + $0x20] sm:$0xf]
    %v352 = vld [vmem:[%s342 + $0x24] sm:$0xf]
    %v353 = vld [vmem:[%s342 + $0x28] sm:$0xf]
    %v354 = vld [vmem:[%s342 + $0x2c] sm:$0xf]
    %v355 = vld [vmem:[%s342 + $0x30] sm:$0xf]
    %v356 = vld [vmem:[%s342 + $0x34] sm:$0xf]
    %v357 = vld [vmem:[%s342 + $0x38] sm:$0xf]
    %v358 = vld [vmem:[%s342 + $0x3c] sm:$0xf]
    %v359 = vld [vmem:[#allocation2] sm:$0xff]
    %v360 = vld [vmem:[#allocation2 + $0x8] sm:$0xff]
    %v361 = vld [vmem:[#allocation2 + $0x10] sm:$0xff]
    %v362 = vld [vmem:[#allocation2 + $0x18] sm:$0xff]
    %v363 = vld [vmem:[#allocation2 + $0x20] sm:$0xff]
    %v364 = vld [vmem:[#allocation2 + $0x28] sm:$0xff]
    %v365 = vld [vmem:[#allocation2 + $0x30] sm:$0xff]
    %v366 = vld [vmem:[#allocation2 + $0x38] sm:$0xff]
    %v367 = vld [vmem:[#allocation2 + $0x40] sm:$0xff]
    %v368 = vld [vmem:[#allocation2 + $0x48] sm:$0xff]
    %v369 = vld [vmem:[#allocation2 + $0x50] sm:$0xff]
    %v370 = vld [vmem:[#allocation2 + $0x58] sm:$0xff]
    %v371 = vld [vmem:[#allocation2 + $0x60] sm:$0xff]
    %v372 = vld [vmem:[#allocation2 + $0x68] sm:$0xff]
    %v373 = vld [vmem:[#allocation2 + $0x70] sm:$0xff]
    %v374 = vld [vmem:[#allocation2 + $0x78] sm:$0xff]
    %v375 = vpack.c.bf16 %v360, %v359
    %v376 = vpack.c.bf16 %v362, %v361
    %v377 = vpack.c.bf16 %v364, %v363
    %v378 = vpack.c.bf16 %v366, %v365
    %v379 = vpack.c.bf16 %v368, %v367
    %v380 = vpack.c.bf16 %v370, %v369
    %v381 = vpack.c.bf16 %v372, %v371
    %v382 = vpack.c.bf16 %v374, %v373
    %v383 = vld [vmem:[%s2] sm:$0xf]
    %v384 = vld [vmem:[%s2 + $0x4] sm:$0xf]
    %v385 = vld [vmem:[%s2 + $0x8] sm:$0xf]
    %v386 = vld [vmem:[%s2 + $0xc] sm:$0xf]
    %v387 = vld [vmem:[%s2 + $0x10] sm:$0xf]
    %v388 = vld [vmem:[%s2 + $0x14] sm:$0xf]
    %v389 = vld [vmem:[%s2 + $0x18] sm:$0xf]
    %v390 = vld [vmem:[%s2 + $0x1c] sm:$0xf]
    %v391 = vld [vmem:[%s2 + $0x20] sm:$0xf]
    %v392 = vld [vmem:[%s2 + $0x24] sm:$0xf]
    %v393 = vld [vmem:[%s2 + $0x28] sm:$0xf]
    %v394 = vld [vmem:[%s2 + $0x2c] sm:$0xf]
    %v395 = vld [vmem:[%s2 + $0x30] sm:$0xf]
    %v396 = vld [vmem:[%s2 + $0x34] sm:$0xf]
    %v397 = vld [vmem:[%s2 + $0x38] sm:$0xf]
    %v398 = vld [vmem:[%s2 + $0x3c] sm:$0xf]
    %v399 = vld [vmem:[%s3] sm:$0xf]
    %v400 = vld [vmem:[%s3 + $0x4] sm:$0xf]
    %v401 = vld [vmem:[%s3 + $0x8] sm:$0xf]
    %v402 = vld [vmem:[%s3 + $0xc] sm:$0xf]
    %v403 = vld [vmem:[%s3 + $0x10] sm:$0xf]
    %v404 = vld [vmem:[%s3 + $0x14] sm:$0xf]
    %v405 = vld [vmem:[%s3 + $0x18] sm:$0xf]
    %v406 = vld [vmem:[%s3 + $0x1c] sm:$0xf]
    %v407 = vld [vmem:[%s3 + $0x20] sm:$0xf]
    %v408 = vld [vmem:[%s3 + $0x24] sm:$0xf]
    %v409 = vld [vmem:[%s3 + $0x28] sm:$0xf]
    %v410 = vld [vmem:[%s3 + $0x2c] sm:$0xf]
    %v411 = vld [vmem:[%s3 + $0x30] sm:$0xf]
    %v412 = vld [vmem:[%s3 + $0x34] sm:$0xf]
    %v413 = vld [vmem:[%s3 + $0x38] sm:$0xf]
    %v414 = vld [vmem:[%s3 + $0x3c] sm:$0xf]
    %v431 = vunpack.c.l.b16 %v343
    %v432 = vunpack.c.l.b16 %v344
    %v433 = vunpack.c.l.b16 %v345
    %v434 = vunpack.c.l.b16 %v346
    %v435 = vunpack.c.l.b16 %v347
    %v436 = vunpack.c.l.b16 %v348
    %v437 = vunpack.c.l.b16 %v349
    %v438 = vunpack.c.l.b16 %v350
    %v439 = vunpack.c.l.b16 %v351
    %v440 = vunpack.c.l.b16 %v352
    %v441 = vunpack.c.l.b16 %v353
    %v442 = vunpack.c.l.b16 %v354
    %v443 = vunpack.c.l.b16 %v355
    %v444 = vunpack.c.l.b16 %v356
    %v445 = vunpack.c.l.b16 %v357
    %v446 = vunpack.c.l.b16 %v358
    %v447 = vpack.c.b16 %v432, %v431
    %v448 = vpack.c.b16 %v434, %v433
    %v449 = vpack.c.b16 %v436, %v435
    %v450 = vpack.c.b16 %v438, %v437
    %v451 = vpack.c.b16 %v440, %v439
    %v452 = vpack.c.b16 %v442, %v441
    %v453 = vpack.c.b16 %v444, %v443
    %v454 = vpack.c.b16 %v446, %v445
    %v479 = vunpack.c.l.b16 %v399
    %v480 = vunpack.c.l.b16 %v400
    %v481 = vunpack.c.l.b16 %v401
    %v482 = vunpack.c.l.b16 %v402
    %v483 = vunpack.c.l.b16 %v403
    %v484 = vunpack.c.l.b16 %v404
    %v485 = vunpack.c.l.b16 %v405
    %v486 = vunpack.c.l.b16 %v406
    %v487 = vunpack.c.l.b16 %v407
    %v488 = vunpack.c.l.b16 %v408
    %v489 = vunpack.c.l.b16 %v409
    %v490 = vunpack.c.l.b16 %v410
    %v491 = vunpack.c.l.b16 %v411
    %v492 = vunpack.c.l.b16 %v412
    %v493 = vunpack.c.l.b16 %v413
    %v494 = vunpack.c.l.b16 %v414
    %v495 = vpack.c.b16 %v480, %v479
    %v496 = vpack.c.b16 %v482, %v481
    %v497 = vpack.c.b16 %v484, %v483
    %v498 = vpack.c.b16 %v486, %v485
    %v499 = vpack.c.b16 %v488, %v487
    %v500 = vpack.c.b16 %v490, %v489
    %v501 = vpack.c.b16 %v492, %v491
    %v502 = vpack.c.b16 %v494, %v493
    %511 = vmatprep.subr.bf16.mxu0 0
    %512 = vmatpush1.bf16.msra.mxu0 %v495
    %513 = vmatprep.subr.bf16.mxu0 0
    %514 = vmatpush1.bf16.msra.mxu0 %v496
    %515 = vmatprep.subr.bf16.mxu0 0
    %516 = vmatpush1.bf16.msra.mxu0 %v497
    %517 = vmatprep.subr.bf16.mxu0 0
    %518 = vmatpush1.bf16.msra.mxu0 %v498
    %519 = vmatprep.subr.bf16.mxu0 0
    %520 = vmatpush1.bf16.msra.mxu0 %v499
    %521 = vmatprep.subr.bf16.mxu0 0
    %522 = vmatpush1.bf16.msra.mxu0 %v500
    %523 = vmatprep.subr.bf16.mxu0 0
    %524 = vmatpush1.bf16.msra.mxu0 %v501
    %525 = vmatprep.subr.bf16.mxu0 0
    %526 = vmatpush1.bf16.msra.mxu0 %v502
    %527 = vmatprep.subr.bf16.mxu0 0
    %528 = vmatpush1.bf16.msra.mxu0 0
    %529 = vmatprep.subr.bf16.mxu0 0
    %530 = vmatpush1.bf16.msra.mxu0 0
    %531 = vmatprep.subr.bf16.mxu0 0
    %532 = vmatpush1.bf16.msra.mxu0 0
    %533 = vmatprep.subr.bf16.mxu0 0
    %534 = vmatpush1.bf16.msra.mxu0 0
    %535 = vmatprep.subr.bf16.mxu0 0
    %536 = vmatpush1.bf16.msra.mxu0 0
    %537 = vmatprep.subr.bf16.mxu0 0
    %538 = vmatpush1.bf16.msra.mxu0 0
    %539 = vmatprep.subr.bf16.mxu0 0
    %540 = vmatpush1.bf16.msra.mxu0 0
    %541 = vmatprep.subr.bf16.mxu0 0
    %542 = vmatpush1.bf16.msra.mxu0 0
    %543 = vmatprep.mubr.bf16.mxu0 0
    %544 = vmatmul.mubr.bf16.gmra.mrb[0].mxu0 %v447
    %v545 = vpop.f32.mrb[0].mxu0
    %v546 = vadd.f32 0.0, %v545
    %v547 = vpop.f32.mrb[0].mxu0
    %v548 = vpop.f32.mrb[0].mxu0
    %v549 = vadd.f32 0.0, %v548
    %v550 = vpop.f32.mrb[0].mxu0
    %551 = vmatprep.mubr.bf16.mxu0 0
    %552 = vmatmul.mubr.bf16.gmra.mrb[0].mxu0 %v448
    %v553 = vpop.f32.mrb[0].mxu0
    %v554 = vadd.f32 0.0, %v553
    %v555 = vpop.f32.mrb[0].mxu0
    %v556 = vpop.f32.mrb[0].mxu0
    %v557 = vadd.f32 0.0, %v556
    %v558 = vpop.f32.mrb[0].mxu0
    %559 = vmatprep.mubr.bf16.mxu0 0
    %560 = vmatmul.mubr.bf16.gmra.mrb[0].mxu0 %v449
    %v561 = vpop.f32.mrb[0].mxu0
    %v562 = vadd.f32 0.0, %v561
    %v563 = vpop.f32.mrb[0].mxu0
    %v564 = vpop.f32.mrb[0].mxu0
    %v565 = vadd.f32 0.0, %v564
    %v566 = vpop.f32.mrb[0].mxu0
    %567 = vmatprep.mubr.bf16.mxu0 0
    %568 = vmatmul.mubr.bf16.gmra.mrb[0].mxu0 %v450
    %v569 = vpop.f32.mrb[0].mxu0
    %v570 = vadd.f32 0.0, %v569
    %v571 = vpop.f32.mrb[0].mxu0
    %v572 = vpop.f32.mrb[0].mxu0
    %v573 = vadd.f32 0.0, %v572
    %v574 = vpop.f32.mrb[0].mxu0
    %575 = vmatprep.mubr.bf16.mxu0 0
    %576 = vmatmul.mubr.bf16.gmra.mrb[0].mxu0 %v451
    %v577 = vpop.f32.mrb[0].mxu0
    %v578 = vadd.f32 0.0, %v577
    %v579 = vpop.f32.mrb[0].mxu0
    %v580 = vpop.f32.mrb[0].mxu0
    %v581 = vadd.f32 0.0, %v580
    %v582 = vpop.f32.mrb[0].mxu0
    %583 = vmatprep.mubr.bf16.mxu0 0
    %584 = vmatmul.mubr.bf16.gmra.mrb[0].mxu0 %v452
    %v585 = vpop.f32.mrb[0].mxu0
    %v586 = vadd.f32 0.0, %v585
    %v587 = vpop.f32.mrb[0].mxu0
    %v588 = vpop.f32.mrb[0].mxu0
    %v589 = vadd.f32 0.0, %v588
    %v590 = vpop.f32.mrb[0].mxu0
    %591 = vmatprep.mubr.bf16.mxu0 0
    %592 = vmatmul.mubr.bf16.gmra.mrb[0].mxu0 %v453
    %v593 = vpop.f32.mrb[0].mxu0
    %v594 = vadd.f32 0.0, %v593
    %v595 = vpop.f32.mrb[0].mxu0
    %v596 = vpop.f32.mrb[0].mxu0
    %v597 = vadd.f32 0.0, %v596
    %v598 = vpop.f32.mrb[0].mxu0
    %599 = vmatprep.mubr.bf16.mxu0 0
    %600 = vmatmul.mubr.bf16.gmra.mrb[0].mxu0 %v454
    %v601 = vpop.f32.mrb[0].mxu0
    %v602 = vadd.f32 0.0, %v601
    %v603 = vpop.f32.mrb[0].mxu0
    %v604 = vpop.f32.mrb[0].mxu0
    %v605 = vadd.f32 0.0, %v604
    %v606 = vpop.f32.mrb[0].mxu0
    %607 = vdwg.mxu0
    %v624 = vunpack.c.l.b16 %v383
    %v625 = vunpack.c.l.b16 %v384
    %v626 = vunpack.c.l.b16 %v385
    %v627 = vunpack.c.l.b16 %v386
    %v628 = vunpack.c.l.b16 %v387
    %v629 = vunpack.c.l.b16 %v388
    %v630 = vunpack.c.l.b16 %v389
    %v631 = vunpack.c.l.b16 %v390
    %v632 = vunpack.c.l.b16 %v391
    %v633 = vunpack.c.l.b16 %v392
    %v634 = vunpack.c.l.b16 %v393
    %v635 = vunpack.c.l.b16 %v394
    %v636 = vunpack.c.l.b16 %v395
    %v637 = vunpack.c.l.b16 %v396
    %v638 = vunpack.c.l.b16 %v397
    %v639 = vunpack.c.l.b16 %v398
    %v640 = vpack.c.b16 %v625, %v624
    %v641 = vpack.c.b16 %v627, %v626
    %v642 = vpack.c.b16 %v629, %v628
    %v643 = vpack.c.b16 %v631, %v630
    %v644 = vpack.c.b16 %v633, %v632
    %v645 = vpack.c.b16 %v635, %v634
    %v646 = vpack.c.b16 %v637, %v636
    %v647 = vpack.c.b16 %v639, %v638
    %656 = vmatprep.subr.bf16.mxu0 0
    %657 = vmatpush1.bf16.msra.mxu0 %v640
    %658 = vmatprep.subr.bf16.mxu0 0
    %659 = vmatpush1.bf16.msra.mxu0 %v641
    %660 = vmatprep.subr.bf16.mxu0 0
    %661 = vmatpush1.bf16.msra.mxu0 %v642
    %662 = vmatprep.subr.bf16.mxu0 0
    %663 = vmatpush1.bf16.msra.mxu0 %v643
    %664 = vmatprep.subr.bf16.mxu0 0
    %665 = vmatpush1.bf16.msra.mxu0 %v644
    %666 = vmatprep.subr.bf16.mxu0 0
    %667 = vmatpush1.bf16.msra.mxu0 %v645
    %668 = vmatprep.subr.bf16.mxu0 0
    %669 = vmatpush1.bf16.msra.mxu0 %v646
    %670 = vmatprep.subr.bf16.mxu0 0
    %671 = vmatpush1.bf16.msra.mxu0 %v647
    %672 = vmatprep.subr.bf16.mxu0 0
    %673 = vmatpush1.bf16.msra.mxu0 0
    %674 = vmatprep.subr.bf16.mxu0 0
    %675 = vmatpush1.bf16.msra.mxu0 0
    %676 = vmatprep.subr.bf16.mxu0 0
    %677 = vmatpush1.bf16.msra.mxu0 0
    %678 = vmatprep.subr.bf16.mxu0 0
    %679 = vmatpush1.bf16.msra.mxu0 0
    %680 = vmatprep.subr.bf16.mxu0 0
    %681 = vmatpush1.bf16.msra.mxu0 0
    %682 = vmatprep.subr.bf16.mxu0 0
    %683 = vmatpush1.bf16.msra.mxu0 0
    %684 = vmatprep.subr.bf16.mxu0 0
    %685 = vmatpush1.bf16.msra.mxu0 0
    %686 = vmatprep.subr.bf16.mxu0 0
    %687 = vmatpush1.bf16.msra.mxu0 0
    %688 = vmatprep.mubr.bf16.mxu0 0
    %689 = vmatmul.mubr.bf16.gmra.mrb[0].mxu0 %v375
    %v690 = vpop.f32.mrb[0].mxu0
    %v691 = vadd.f32 %v546, %v690
    %v692 = vpop.f32.mrb[0].mxu0
    %v693 = vpop.f32.mrb[0].mxu0
    %v694 = vadd.f32 %v549, %v693
    %v695 = vpop.f32.mrb[0].mxu0
    %696 = vmatprep.mubr.bf16.mxu0 0
    %697 = vmatmul.mubr.bf16.gmra.mrb[0].mxu0 %v376
    %v698 = vpop.f32.mrb[0].mxu0
    %v699 = vadd.f32 %v554, %v698
    %v700 = vpop.f32.mrb[0].mxu0
    %v701 = vpop.f32.mrb[0].mxu0
    %v702 = vadd.f32 %v557, %v701
    %v703 = vpop.f32.mrb[0].mxu0
    %704 = vmatprep.mubr.bf16.mxu0 0
    %705 = vmatmul.mubr.bf16.gmra.mrb[0].mxu0 %v377
    %v706 = vpop.f32.mrb[0].mxu0
    %v707 = vadd.f32 %v562, %v706
    %v708 = vpop.f32.mrb[0].mxu0
    %v709 = vpop.f32.mrb[0].mxu0
    %v710 = vadd.f32 %v565, %v709
    %v711 = vpop.f32.mrb[0].mxu0
    %712 = vmatprep.mubr.bf16.mxu0 0
    %713 = vmatmul.mubr.bf16.gmra.mrb[0].mxu0 %v378
    %v714 = vpop.f32.mrb[0].mxu0
    %v715 = vadd.f32 %v570, %v714
    %v716 = vpop.f32.mrb[0].mxu0
    %v717 = vpop.f32.mrb[0].mxu0
    %v718 = vadd.f32 %v573, %v717
    %v719 = vpop.f32.mrb[0].mxu0
    %720 = vmatprep.mubr.bf16.mxu0 0
    %721 = vmatmul.mubr.bf16.gmra.mrb[0].mxu0 %v379
    %v722 = vpop.f32.mrb[0].mxu0
    %v723 = vadd.f32 %v578, %v722
    %v724 = vpop.f32.mrb[0].mxu0
    %v725 = vpop.f32.mrb[0].mxu0
    %v726 = vadd.f32 %v581, %v725
    %v727 = vpop.f32.mrb[0].mxu0
    %728 = vmatprep.mubr.bf16.mxu0 0
    %729 = vmatmul.mubr.bf16.gmra.mrb[0].mxu0 %v380
    %v730 = vpop.f32.mrb[0].mxu0
    %v731 = vadd.f32 %v586, %v730
    %v732 = vpop.f32.mrb[0].mxu0
    %v733 = vpop.f32.mrb[0].mxu0
    %v734 = vadd.f32 %v589, %v733
    %v735 = vpop.f32.mrb[0].mxu0
    %736 = vmatprep.mubr.bf16.mxu0 0
    %737 = vmatmul.mubr.bf16.gmra.mrb[0].mxu0 %v381
    %v738 = vpop.f32.mrb[0].mxu0
    %v739 = vadd.f32 %v594, %v738
    %v740 = vpop.f32.mrb[0].mxu0
    %v741 = vpop.f32.mrb[0].mxu0
    %v742 = vadd.f32 %v597, %v741
    %v743 = vpop.f32.mrb[0].mxu0
    %744 = vmatprep.mubr.bf16.mxu0 0
    %745 = vmatmul.mubr.bf16.gmra.mrb[0].mxu0 %v382
    %v746 = vpop.f32.mrb[0].mxu0
    %v747 = vadd.f32 %v602, %v746
    %v748 = vpop.f32.mrb[0].mxu0
    %v749 = vpop.f32.mrb[0].mxu0
    %v750 = vadd.f32 %v605, %v749
    %v751 = vpop.f32.mrb[0].mxu0
    %752 = vdwg.mxu0
    %v753 = vld [vmem:[%s4] sm:$0x1]
    %v755 = vlaneseq
    %v756 = vshrl.u32 %v755, 7
    %v757 = vsub.s32 0, %v756
    %v758 = vrot.slane %v753, %v757
    %v760 = vadd.f32 %v691, %v758
    %v761 = vadd.f32 %v694, %v758
    %v762 = vadd.f32 %v699, %v758
    %v763 = vadd.f32 %v702, %v758
    %v764 = vadd.f32 %v707, %v758
    %v765 = vadd.f32 %v710, %v758
    %v766 = vadd.f32 %v715, %v758
    %v767 = vadd.f32 %v718, %v758
    %v768 = vadd.f32 %v723, %v758
    %v769 = vadd.f32 %v726, %v758
    %v770 = vadd.f32 %v731, %v758
    %v771 = vadd.f32 %v734, %v758
    %v772 = vadd.f32 %v739, %v758
    %v773 = vadd.f32 %v742, %v758
    %v774 = vadd.f32 %v747, %v758
    %v775 = vadd.f32 %v750, %v758
    %v776 = vpack.c.bf16 %v761, %v760
    %v777 = vpack.c.bf16 %v763, %v762
    %v778 = vpack.c.bf16 %v765, %v764
    %v779 = vpack.c.bf16 %v767, %v766
    %v780 = vpack.c.bf16 %v769, %v768
    %v781 = vpack.c.bf16 %v771, %v770
    %v782 = vpack.c.bf16 %v773, %v772
    %v783 = vpack.c.bf16 %v775, %v774
    %v792 = vunpack.c.l.b16 %v776
    %v793 = vunpack.c.h.b16 %v776
    %v794 = vunpack.c.l.b16 %v777
    %v795 = vunpack.c.h.b16 %v777
    %v796 = vunpack.c.l.b16 %v778
    %v797 = vunpack.c.h.b16 %v778
    %v798 = vunpack.c.l.b16 %v779
    %v799 = vunpack.c.h.b16 %v779
    %v800 = vunpack.c.l.b16 %v780
    %v801 = vunpack.c.h.b16 %v780
    %v802 = vunpack.c.l.b16 %v781
    %v803 = vunpack.c.h.b16 %v781
    %v804 = vunpack.c.l.b16 %v782
    %v805 = vunpack.c.h.b16 %v782
    %v806 = vunpack.c.l.b16 %v783
    %v807 = vunpack.c.h.b16 %v783
    %v808 = vpack.c.b16 %v792, %v792
    %v809 = vpack.c.b16 %v793, %v793
    %v810 = vpack.c.b16 %v794, %v794
    %v811 = vpack.c.b16 %v795, %v795
    %v812 = vpack.c.b16 %v796, %v796
    %v813 = vpack.c.b16 %v797, %v797
    %v814 = vpack.c.b16 %v798, %v798
    %v815 = vpack.c.b16 %v799, %v799
    %v816 = vpack.c.b16 %v800, %v800
    %v817 = vpack.c.b16 %v801, %v801
    %v818 = vpack.c.b16 %v802, %v802
    %v819 = vpack.c.b16 %v803, %v803
    %v820 = vpack.c.b16 %v804, %v804
    %v821 = vpack.c.b16 %v805, %v805
    %v822 = vpack.c.b16 %v806, %v806
    %v823 = vpack.c.b16 %v807, %v807
    %840 = vst [vmem:[%s5] sm:$0xf] %v808
    %841 = vst [vmem:[%s5 + $0x4] sm:$0xf] %v809
    %842 = vst [vmem:[%s5 + $0x8] sm:$0xf] %v810
    %843 = vst [vmem:[%s5 + $0xc] sm:$0xf] %v811
    %844 = vst [vmem:[%s5 + $0x10] sm:$0xf] %v812
    %845 = vst [vmem:[%s5 + $0x14] sm:$0xf] %v813
    %846 = vst [vmem:[%s5 + $0x18] sm:$0xf] %v814
    %847 = vst [vmem:[%s5 + $0x1c] sm:$0xf] %v815
    %848 = vst [vmem:[%s5 + $0x20] sm:$0xf] %v816
    %849 = vst [vmem:[%s5 + $0x24] sm:$0xf] %v817
    %850 = vst [vmem:[%s5 + $0x28] sm:$0xf] %v818
    %851 = vst [vmem:[%s5 + $0x2c] sm:$0xf] %v819
    %852 = vst [vmem:[%s5 + $0x30] sm:$0xf] %v820
    %853 = vst [vmem:[%s5 + $0x34] sm:$0xf] %v821
    %854 = vst [vmem:[%s5 + $0x38] sm:$0xf] %v822
    %855 = vst [vmem:[%s5 + $0x3c] sm:$0xf] %v823
  $region29: #{vanilla_graph_conv_forward.6} parent=0 // pred_fallthru
    _
  // Predicated region
  $region30: #{vanilla_graph_conv_forward.6} parent=0 // pred_check
    _
  $region31: #{vanilla_graph_conv_forward.6} parent=0 // pred_check_branch
    %857 = sbr.rel (0) target = $region33
  $region32: #{vanilla_graph_conv_forward.6} parent=0 // pred_region
    _
  $region33: #{vanilla_graph_conv_forward.6} parent=0 // pred_fallthru
    _
  // Predicated region
  $region34: #{vanilla_graph_conv_forward.6} parent=0 // pred_check
    _
  $region35: #{vanilla_graph_conv_forward.6} parent=0 // pred_check_branch
    %859 = sbr.rel (0) target = $region37
  $region36: #{vanilla_graph_conv_forward.6} parent=0 // pred_region
    _
  $region37: #{vanilla_graph_conv_forward.6} parent=0 // pred_fallthru
    _

// kernel: vanilla_graph_conv_forward.4
$region0: #{vanilla_graph_conv_forward.4}
  #allocation0 [shape = 'u32[]', space=smem, size = 0x4, offset = 0x4, fixed_abs, tag = 'smem constant byte address 0x4 - core index']
  #allocation1 [shape = 'u32[144,128]{1,0:T(1,128)}', space=vmem, size = 0x12000, scoped, tag = 'internal scratch']
  #allocation2 [shape = 'f32[128,128]{1,0:T(8,128)}', space=vmem, size = 0x10000, scoped, tag = 'scratch operand']
  %s0 = inlined_call_operand.vmem [shape: s8[128,128], index: 0, kind: input, shape index: {}]
  %s1 = inlined_call_operand.vmem [shape: bf16[128,128], index: 1, kind: input, shape index: {}]
  %s2 = inlined_call_operand.vmem [shape: bf16[128,128], index: 2, kind: input, shape index: {}]
  %s3 = inlined_call_operand.vmem [shape: bf16[128,128], index: 3, kind: input, shape index: {}]
  %s4 = inlined_call_operand.vmem [shape: f32[1,128], index: 4, kind: input, shape index: {}]
  %s5 = inlined_call_operand.vmem [shape: bf16[128,128], index: 5, kind: output, shape index: {}]
  %s6 = sld [smem:[#allocation0]]
  $region38: #{vanilla_graph_conv_forward.4} parent=0
    _
  %s8 = ssub.s32 1, %s6
  %s9 = scalar_select 0, %s8, %s6
  // Predicated region
  $region2: #{vanilla_graph_conv_forward.4} parent=0 // pred_check
    _
  $region3: #{vanilla_graph_conv_forward.4} parent=0 // pred_check_branch
    %11 = sbr.rel (0) target = $region5
  $region4: #{vanilla_graph_conv_forward.4} parent=0 // pred_region
    _
  $region5: #{vanilla_graph_conv_forward.4} parent=0 // pred_fallthru
    _
  // Predicated region
  $region6: #{vanilla_graph_conv_forward.4} parent=0 // pred_check
    _
  $region7: #{vanilla_graph_conv_forward.4} parent=0 // pred_check_branch
    %13 = sbr.rel (0) target = $region9
  $region8: #{vanilla_graph_conv_forward.4} parent=0 // pred_region
    _
  $region9: #{vanilla_graph_conv_forward.4} parent=0 // pred_fallthru
    _
  // Predicated region
  $region10: #{vanilla_graph_conv_forward.4} parent=0 // pred_check
    _
  $region11: #{vanilla_graph_conv_forward.4} parent=0 // pred_check_branch
    %15 = sbr.rel (0) target = $region13
  $region12: #{vanilla_graph_conv_forward.4} parent=0 // pred_region
    _
  $region13: #{vanilla_graph_conv_forward.4} parent=0 // pred_fallthru
    _
  // Predicated region
  $region14: #{vanilla_graph_conv_forward.4} parent=0 // pred_check
    _
  $region15: #{vanilla_graph_conv_forward.4} parent=0 // pred_check_branch
    %17 = sbr.rel (0) target = $region17
  $region16: #{vanilla_graph_conv_forward.4} parent=0 // pred_region
    _
  $region17: #{vanilla_graph_conv_forward.4} parent=0 // pred_fallthru
    _
  // Predicated region
  $region18: #{vanilla_graph_conv_forward.4} parent=0 // pred_check
    _
  $region19: #{vanilla_graph_conv_forward.4} parent=0 // pred_check_branch
    %19 = sbr.rel (0) target = $region21
  $region20: #{vanilla_graph_conv_forward.4} parent=0 // pred_region
    _
  $region21: #{vanilla_graph_conv_forward.4} parent=0 // pred_fallthru
    _
  %p21 = scmp.eq.s32.totalorder 0, 0
  // Predicated region
  $region22: #{vanilla_graph_conv_forward.4} parent=0 // pred_check
    %p22 = pneg %p21
  $region23: #{vanilla_graph_conv_forward.4} parent=0 // pred_check_branch
    %24 = sbr.rel (%p22) target = $region25
  $region24: #{vanilla_graph_conv_forward.4} parent=0 // pred_region
    %25 = vst [vmem:[#allocation2] sm:$0xff] 0.0
    %26 = vst [vmem:[#allocation2 + $0x8] sm:$0xff] 0.0
    %27 = vst [vmem:[#allocation2 + $0x10] sm:$0xff] 0.0
    %28 = vst [vmem:[#allocation2 + $0x18] sm:$0xff] 0.0
    %29 = vst [vmem:[#allocation2 + $0x20] sm:$0xff] 0.0
    %30 = vst [vmem:[#allocation2 + $0x28] sm:$0xff] 0.0
    %31 = vst [vmem:[#allocation2 + $0x30] sm:$0xff] 0.0
    %32 = vst [vmem:[#allocation2 + $0x38] sm:$0xff] 0.0
    %33 = vst [vmem:[#allocation2 + $0x40] sm:$0xff] 0.0
    %34 = vst [vmem:[#allocation2 + $0x48] sm:$0xff] 0.0
    %35 = vst [vmem:[#allocation2 + $0x50] sm:$0xff] 0.0
    %36 = vst [vmem:[#allocation2 + $0x58] sm:$0xff] 0.0
    %37 = vst [vmem:[#allocation2 + $0x60] sm:$0xff] 0.0
    %38 = vst [vmem:[#allocation2 + $0x68] sm:$0xff] 0.0
    %39 = vst [vmem:[#allocation2 + $0x70] sm:$0xff] 0.0
    %40 = vst [vmem:[#allocation2 + $0x78] sm:$0xff] 0.0
  $region25: #{vanilla_graph_conv_forward.4} parent=0 // pred_fallthru
    _
  %v41 = vld [vmem:[%s0] sm:$0x3]
  %v42 = vld [vmem:[%s0 + $0x2] sm:$0x3]
  %v43 = vld [vmem:[%s0 + $0x4] sm:$0x3]
  %v44 = vld [vmem:[%s0 + $0x6] sm:$0x3]
  %v45 = vld [vmem:[%s0 + $0x8] sm:$0x3]
  %v46 = vld [vmem:[%s0 + $0xa] sm:$0x3]
  %v47 = vld [vmem:[%s0 + $0xc] sm:$0x3]
  %v48 = vld [vmem:[%s0 + $0xe] sm:$0x3]
  %v49 = vld [vmem:[%s0 + $0x10] sm:$0x3]
  %v50 = vld [vmem:[%s0 + $0x12] sm:$0x3]
  %v51 = vld [vmem:[%s0 + $0x14] sm:$0x3]
  %v52 = vld [vmem:[%s0 + $0x16] sm:$0x3]
  %v53 = vld [vmem:[%s0 + $0x18] sm:$0x3]
  %v54 = vld [vmem:[%s0 + $0x1a] sm:$0x3]
  %v55 = vld [vmem:[%s0 + $0x1c] sm:$0x3]
  %v56 = vld [vmem:[%s0 + $0x1e] sm:$0x3]
  %v57 = vunpack.c.l.s8.bf16 %v41
  %v58 = vunpack.c.l.s8.bf16 %v42
  %v59 = vunpack.c.l.s8.bf16 %v43
  %v60 = vunpack.c.l.s8.bf16 %v44
  %v61 = vunpack.c.l.s8.bf16 %v45
  %v62 = vunpack.c.l.s8.bf16 %v46
  %v63 = vunpack.c.l.s8.bf16 %v47
  %v64 = vunpack.c.l.s8.bf16 %v48
  %v65 = vunpack.c.l.s8.bf16 %v49
  %v66 = vunpack.c.l.s8.bf16 %v50
  %v67 = vunpack.c.l.s8.bf16 %v51
  %v68 = vunpack.c.l.s8.bf16 %v52
  %v69 = vunpack.c.l.s8.bf16 %v53
  %v70 = vunpack.c.l.s8.bf16 %v54
  %v71 = vunpack.c.l.s8.bf16 %v55
  %v72 = vunpack.c.l.s8.bf16 %v56
  %s73 = smul.u32 0, 128
  %s74 = sshra.s32 %s73, 3
  %s75 = sand.u32 %s73, 7
  %s76 = smul.addr %s74, 4
  %s77 = scalar_lea.vmem %s1, %s76
  %v78 = vld [vmem:[%s77] sm:$0xf]
  %v79 = vld [vmem:[%s77 + $0x4] sm:$0xf]
  %v80 = vld [vmem:[%s77 + $0x8] sm:$0xf]
  %v81 = vld [vmem:[%s77 + $0xc] sm:$0xf]
  %v82 = vld [vmem:[%s77 + $0x10] sm:$0xf]
  %v83 = vld [vmem:[%s77 + $0x14] sm:$0xf]
  %v84 = vld [vmem:[%s77 + $0x18] sm:$0xf]
  %v85 = vld [vmem:[%s77 + $0x1c] sm:$0xf]
  %v86 = vld [vmem:[%s77 + $0x20] sm:$0xf]
  %v87 = vld [vmem:[%s77 + $0x24] sm:$0xf]
  %v88 = vld [vmem:[%s77 + $0x28] sm:$0xf]
  %v89 = vld [vmem:[%s77 + $0x2c] sm:$0xf]
  %v90 = vld [vmem:[%s77 + $0x30] sm:$0xf]
  %v91 = vld [vmem:[%s77 + $0x34] sm:$0xf]
  %v92 = vld [vmem:[%s77 + $0x38] sm:$0xf]
  %v93 = vld [vmem:[%s77 + $0x3c] sm:$0xf]
  %v94 = vld [vmem:[#allocation2] sm:$0xff]
  %v95 = vld [vmem:[#allocation2 + $0x8] sm:$0xff]
  %v96 = vld [vmem:[#allocation2 + $0x10] sm:$0xff]
  %v97 = vld [vmem:[#allocation2 + $0x18] sm:$0xff]
  %v98 = vld [vmem:[#allocation2 + $0x20] sm:$0xff]
  %v99 = vld [vmem:[#allocation2 + $0x28] sm:$0xff]
  %v100 = vld [vmem:[#allocation2 + $0x30] sm:$0xff]
  %v101 = vld [vmem:[#allocation2 + $0x38] sm:$0xff]
  %v102 = vld [vmem:[#allocation2 + $0x40] sm:$0xff]
  %v103 = vld [vmem:[#allocation2 + $0x48] sm:$0xff]
  %v104 = vld [vmem:[#allocation2 + $0x50] sm:$0xff]
  %v105 = vld [vmem:[#allocation2 + $0x58] sm:$0xff]
  %v106 = vld [vmem:[#allocation2 + $0x60] sm:$0xff]
  %v107 = vld [vmem:[#allocation2 + $0x68] sm:$0xff]
  %v108 = vld [vmem:[#allocation2 + $0x70] sm:$0xff]
  %v109 = vld [vmem:[#allocation2 + $0x78] sm:$0xff]
  %v126 = vunpack.c.l.b16 %v57
  %v127 = vunpack.c.l.b16 %v58
  %v128 = vunpack.c.l.b16 %v59
  %v129 = vunpack.c.l.b16 %v60
  %v130 = vunpack.c.l.b16 %v61
  %v131 = vunpack.c.l.b16 %v62
  %v132 = vunpack.c.l.b16 %v63
  %v133 = vunpack.c.l.b16 %v64
  %v134 = vunpack.c.l.b16 %v65
  %v135 = vunpack.c.l.b16 %v66
  %v136 = vunpack.c.l.b16 %v67
  %v137 = vunpack.c.l.b16 %v68
  %v138 = vunpack.c.l.b16 %v69
  %v139 = vunpack.c.l.b16 %v70
  %v140 = vunpack.c.l.b16 %v71
  %v141 = vunpack.c.l.b16 %v72
  %v142 = vpack.c.b16 %v127, %v126
  %v143 = vpack.c.b16 %v129, %v128
  %v144 = vpack.c.b16 %v131, %v130
  %v145 = vpack.c.b16 %v133, %v132
  %v146 = vpack.c.b16 %v135, %v134
  %v147 = vpack.c.b16 %v137, %v136
  %v148 = vpack.c.b16 %v139, %v138
  %v149 = vpack.c.b16 %v141, %v140
  %v174 = vunpack.c.l.b16 %v78
  %v175 = vunpack.c.l.b16 %v79
  %v176 = vunpack.c.l.b16 %v80
  %v177 = vunpack.c.l.b16 %v81
  %v178 = vunpack.c.l.b16 %v82
  %v179 = vunpack.c.l.b16 %v83
  %v180 = vunpack.c.l.b16 %v84
  %v181 = vunpack.c.l.b16 %v85
  %v182 = vunpack.c.l.b16 %v86
  %v183 = vunpack.c.l.b16 %v87
  %v184 = vunpack.c.l.b16 %v88
  %v185 = vunpack.c.l.b16 %v89
  %v186 = vunpack.c.l.b16 %v90
  %v187 = vunpack.c.l.b16 %v91
  %v188 = vunpack.c.l.b16 %v92
  %v189 = vunpack.c.l.b16 %v93
  %v190 = vpack.c.b16 %v175, %v174
  %v191 = vpack.c.b16 %v177, %v176
  %v192 = vpack.c.b16 %v179, %v178
  %v193 = vpack.c.b16 %v181, %v180
  %v194 = vpack.c.b16 %v183, %v182
  %v195 = vpack.c.b16 %v185, %v184
  %v196 = vpack.c.b16 %v187, %v186
  %v197 = vpack.c.b16 %v189, %v188
  %206 = vmatprep.subr.bf16.mxu0 0
  %207 = vmatpush1.bf16.msra.mxu0 %v190
  %208 = vmatprep.subr.bf16.mxu0 0
  %209 = vmatpush1.bf16.msra.mxu0 %v191
  %210 = vmatprep.subr.bf16.mxu0 0
  %211 = vmatpush1.bf16.msra.mxu0 %v192
  %212 = vmatprep.subr.bf16.mxu0 0
  %213 = vmatpush1.bf16.msra.mxu0 %v193
  %214 = vmatprep.subr.bf16.mxu0 0
  %215 = vmatpush1.bf16.msra.mxu0 %v194
  %216 = vmatprep.subr.bf16.mxu0 0
  %217 = vmatpush1.bf16.msra.mxu0 %v195
  %218 = vmatprep.subr.bf16.mxu0 0
  %219 = vmatpush1.bf16.msra.mxu0 %v196
  %220 = vmatprep.subr.bf16.mxu0 0
  %221 = vmatpush1.bf16.msra.mxu0 %v197
  %222 = vmatprep.subr.bf16.mxu0 0
  %223 = vmatpush1.bf16.msra.mxu0 0
  %224 = vmatprep.subr.bf16.mxu0 0
  %225 = vmatpush1.bf16.msra.mxu0 0
  %226 = vmatprep.subr.bf16.mxu0 0
  %227 = vmatpush1.bf16.msra.mxu0 0
  %228 = vmatprep.subr.bf16.mxu0 0
  %229 = vmatpush1.bf16.msra.mxu0 0
  %230 = vmatprep.subr.bf16.mxu0 0
  %231 = vmatpush1.bf16.msra.mxu0 0
  %232 = vmatprep.subr.bf16.mxu0 0
  %233 = vmatpush1.bf16.msra.mxu0 0
  %234 = vmatprep.subr.bf16.mxu0 0
  %235 = vmatpush1.bf16.msra.mxu0 0
  %236 = vmatprep.subr.bf16.mxu0 0
  %237 = vmatpush1.bf16.msra.mxu0 0
  %238 = vmatprep.mubr.bf16.mxu0 0
  %239 = vmatmul.mubr.bf16.gmra.mrb[0].mxu0 %v142
  %v240 = vpop.f32.mrb[0].mxu0
  %v241 = vadd.f32 0.0, %v240
  %v242 = vpop.f32.mrb[0].mxu0
  %v243 = vpop.f32.mrb[0].mxu0
  %v244 = vadd.f32 0.0, %v243
  %v245 = vpop.f32.mrb[0].mxu0
  %246 = vmatprep.mubr.bf16.mxu0 0
  %247 = vmatmul.mubr.bf16.gmra.mrb[0].mxu0 %v143
  %v248 = vpop.f32.mrb[0].mxu0
  %v249 = vadd.f32 0.0, %v248
  %v250 = vpop.f32.mrb[0].mxu0
  %v251 = vpop.f32.mrb[0].mxu0
  %v252 = vadd.f32 0.0, %v251
  %v253 = vpop.f32.mrb[0].mxu0
  %254 = vmatprep.mubr.bf16.mxu0 0
  %255 = vmatmul.mubr.bf16.gmra.mrb[0].mxu0 %v144
  %v256 = vpop.f32.mrb[0].mxu0
  %v257 = vadd.f32 0.0, %v256
  %v258 = vpop.f32.mrb[0].mxu0
  %v259 = vpop.f32.mrb[0].mxu0
  %v260 = vadd.f32 0.0, %v259
  %v261 = vpop.f32.mrb[0].mxu0
  %262 = vmatprep.mubr.bf16.mxu0 0
  %263 = vmatmul.mubr.bf16.gmra.mrb[0].mxu0 %v145
  %v264 = vpop.f32.mrb[0].mxu0
  %v265 = vadd.f32 0.0, %v264
  %v266 = vpop.f32.mrb[0].mxu0
  %v267 = vpop.f32.mrb[0].mxu0
  %v268 = vadd.f32 0.0, %v267
  %v269 = vpop.f32.mrb[0].mxu0
  %270 = vmatprep.mubr.bf16.mxu0 0
  %271 = vmatmul.mubr.bf16.gmra.mrb[0].mxu0 %v146
  %v272 = vpop.f32.mrb[0].mxu0
  %v273 = vadd.f32 0.0, %v272
  %v274 = vpop.f32.mrb[0].mxu0
  %v275 = vpop.f32.mrb[0].mxu0
  %v276 = vadd.f32 0.0, %v275
  %v277 = vpop.f32.mrb[0].mxu0
  %278 = vmatprep.mubr.bf16.mxu0 0
  %279 = vmatmul.mubr.bf16.gmra.mrb[0].mxu0 %v147
  %v280 = vpop.f32.mrb[0].mxu0
  %v281 = vadd.f32 0.0, %v280
  %v282 = vpop.f32.mrb[0].mxu0
  %v283 = vpop.f32.mrb[0].mxu0
  %v284 = vadd.f32 0.0, %v283
  %v285 = vpop.f32.mrb[0].mxu0
  %286 = vmatprep.mubr.bf16.mxu0 0
  %287 = vmatmul.mubr.bf16.gmra.mrb[0].mxu0 %v148
  %v288 = vpop.f32.mrb[0].mxu0
  %v289 = vadd.f32 0.0, %v288
  %v290 = vpop.f32.mrb[0].mxu0
  %v291 = vpop.f32.mrb[0].mxu0
  %v292 = vadd.f32 0.0, %v291
  %v293 = vpop.f32.mrb[0].mxu0
  %294 = vmatprep.mubr.bf16.mxu0 0
  %295 = vmatmul.mubr.bf16.gmra.mrb[0].mxu0 %v149
  %v296 = vpop.f32.mrb[0].mxu0
  %v297 = vadd.f32 0.0, %v296
  %v298 = vpop.f32.mrb[0].mxu0
  %v299 = vpop.f32.mrb[0].mxu0
  %v300 = vadd.f32 0.0, %v299
  %v301 = vpop.f32.mrb[0].mxu0
  %302 = vdwg.mxu0
  %v303 = vadd.f32 %v94, %v241
  %v304 = vadd.f32 %v95, %v244
  %v305 = vadd.f32 %v96, %v249
  %v306 = vadd.f32 %v97, %v252
  %v307 = vadd.f32 %v98, %v257
  %v308 = vadd.f32 %v99, %v260
  %v309 = vadd.f32 %v100, %v265
  %v310 = vadd.f32 %v101, %v268
  %v311 = vadd.f32 %v102, %v273
  %v312 = vadd.f32 %v103, %v276
  %v313 = vadd.f32 %v104, %v281
  %v314 = vadd.f32 %v105, %v284
  %v315 = vadd.f32 %v106, %v289
  %v316 = vadd.f32 %v107, %v292
  %v317 = vadd.f32 %v108, %v297
  %v318 = vadd.f32 %v109, %v300
  %319 = vst [vmem:[#allocation2] sm:$0xff] %v303
  %320 = vst [vmem:[#allocation2 + $0x8] sm:$0xff] %v304
  %321 = vst [vmem:[#allocation2 + $0x10] sm:$0xff] %v305
  %322 = vst [vmem:[#allocation2 + $0x18] sm:$0xff] %v306
  %323 = vst [vmem:[#allocation2 + $0x20] sm:$0xff] %v307
  %324 = vst [vmem:[#allocation2 + $0x28] sm:$0xff] %v308
  %325 = vst [vmem:[#allocation2 + $0x30] sm:$0xff] %v309
  %326 = vst [vmem:[#allocation2 + $0x38] sm:$0xff] %v310
  %327 = vst [vmem:[#allocation2 + $0x40] sm:$0xff] %v311
  %328 = vst [vmem:[#allocation2 + $0x48] sm:$0xff] %v312
  %329 = vst [vmem:[#allocation2 + $0x50] sm:$0xff] %v313
  %330 = vst [vmem:[#allocation2 + $0x58] sm:$0xff] %v314
  %331 = vst [vmem:[#allocation2 + $0x60] sm:$0xff] %v315
  %332 = vst [vmem:[#allocation2 + $0x68] sm:$0xff] %v316
  %333 = vst [vmem:[#allocation2 + $0x70] sm:$0xff] %v317
  %334 = vst [vmem:[#allocation2 + $0x78] sm:$0xff] %v318
  // Predicated region
  $region26: #{vanilla_graph_conv_forward.4} parent=0 // pred_check
    %p335 = pneg %p21
  $region27: #{vanilla_graph_conv_forward.4} parent=0 // pred_check_branch
    %337 = sbr.rel (%p335) target = $region29
  $region28: #{vanilla_graph_conv_forward.4} parent=0 // pred_region
    %s338 = smul.u32 0, 128
    %s339 = sshra.s32 %s338, 3
    %s340 = sand.u32 %s338, 7
    %s341 = smul.addr %s339, 4
    %s342 = scalar_lea.vmem %s1, %s341
    %v343 = vld [vmem:[%s342] sm:$0xf]
    %v344 = vld [vmem:[%s342 + $0x4] sm:$0xf]
    %v345 = vld [vmem:[%s342 + $0x8] sm:$0xf]
    %v346 = vld [vmem:[%s342 + $0xc] sm:$0xf]
    %v347 = vld [vmem:[%s342 + $0x10] sm:$0xf]
    %v348 = vld [vmem:[%s342 + $0x14] sm:$0xf]
    %v349 = vld [vmem:[%s342 + $0x18] sm:$0xf]
    %v350 = vld [vmem:[%s342 + $0x1c] sm:$0xf]
    %v351 = vld [vmem:[%s342 + $0x20] sm:$0xf]
    %v352 = vld [vmem:[%s342 + $0x24] sm:$0xf]
    %v353 = vld [vmem:[%s342 + $0x28] sm:$0xf]
    %v354 = vld [vmem:[%s342 + $0x2c] sm:$0xf]
    %v355 = vld [vmem:[%s342 + $0x30] sm:$0xf]
    %v356 = vld [vmem:[%s342 + $0x34] sm:$0xf]
    %v357 = vld [vmem:[%s342 + $0x38] sm:$0xf]
    %v358 = vld [vmem:[%s342 + $0x3c] sm:$0xf]
    %v359 = vld [vmem:[#allocation2] sm:$0xff]
    %v360 = vld [vmem:[#allocation2 + $0x8] sm:$0xff]
    %v361 = vld [vmem:[#allocation2 + $0x10] sm:$0xff]
    %v362 = vld [vmem:[#allocation2 + $0x18] sm:$0xff]
    %v363 = vld [vmem:[#allocation2 + $0x20] sm:$0xff]
    %v364 = vld [vmem:[#allocation2 + $0x28] sm:$0xff]
    %v365 = vld [vmem:[#allocation2 + $0x30] sm:$0xff]
    %v366 = vld [vmem:[#allocation2 + $0x38] sm:$0xff]
    %v367 = vld [vmem:[#allocation2 + $0x40] sm:$0xff]
    %v368 = vld [vmem:[#allocation2 + $0x48] sm:$0xff]
    %v369 = vld [vmem:[#allocation2 + $0x50] sm:$0xff]
    %v370 = vld [vmem:[#allocation2 + $0x58] sm:$0xff]
    %v371 = vld [vmem:[#allocation2 + $0x60] sm:$0xff]
    %v372 = vld [vmem:[#allocation2 + $0x68] sm:$0xff]
    %v373 = vld [vmem:[#allocation2 + $0x70] sm:$0xff]
    %v374 = vld [vmem:[#allocation2 + $0x78] sm:$0xff]
    %v375 = vpack.c.bf16 %v360, %v359
    %v376 = vpack.c.bf16 %v362, %v361
    %v377 = vpack.c.bf16 %v364, %v363
    %v378 = vpack.c.bf16 %v366, %v365
    %v379 = vpack.c.bf16 %v368, %v367
    %v380 = vpack.c.bf16 %v370, %v369
    %v381 = vpack.c.bf16 %v372, %v371
    %v382 = vpack.c.bf16 %v374, %v373
    %v383 = vld [vmem:[%s2] sm:$0xf]
    %v384 = vld [vmem:[%s2 + $0x4] sm:$0xf]
    %v385 = vld [vmem:[%s2 + $0x8] sm:$0xf]
    %v386 = vld [vmem:[%s2 + $0xc] sm:$0xf]
    %v387 = vld [vmem:[%s2 + $0x10] sm:$0xf]
    %v388 = vld [vmem:[%s2 + $0x14] sm:$0xf]
    %v389 = vld [vmem:[%s2 + $0x18] sm:$0xf]
    %v390 = vld [vmem:[%s2 + $0x1c] sm:$0xf]
    %v391 = vld [vmem:[%s2 + $0x20] sm:$0xf]
    %v392 = vld [vmem:[%s2 + $0x24] sm:$0xf]
    %v393 = vld [vmem:[%s2 + $0x28] sm:$0xf]
    %v394 = vld [vmem:[%s2 + $0x2c] sm:$0xf]
    %v395 = vld [vmem:[%s2 + $0x30] sm:$0xf]
    %v396 = vld [vmem:[%s2 + $0x34] sm:$0xf]
    %v397 = vld [vmem:[%s2 + $0x38] sm:$0xf]
    %v398 = vld [vmem:[%s2 + $0x3c] sm:$0xf]
    %v399 = vld [vmem:[%s3] sm:$0xf]
    %v400 = vld [vmem:[%s3 + $0x4] sm:$0xf]
    %v401 = vld [vmem:[%s3 + $0x8] sm:$0xf]
    %v402 = vld [vmem:[%s3 + $0xc] sm:$0xf]
    %v403 = vld [vmem:[%s3 + $0x10] sm:$0xf]
    %v404 = vld [vmem:[%s3 + $0x14] sm:$0xf]
    %v405 = vld [vmem:[%s3 + $0x18] sm:$0xf]
    %v406 = vld [vmem:[%s3 + $0x1c] sm:$0xf]
    %v407 = vld [vmem:[%s3 + $0x20] sm:$0xf]
    %v408 = vld [vmem:[%s3 + $0x24] sm:$0xf]
    %v409 = vld [vmem:[%s3 + $0x28] sm:$0xf]
    %v410 = vld [vmem:[%s3 + $0x2c] sm:$0xf]
    %v411 = vld [vmem:[%s3 + $0x30] sm:$0xf]
    %v412 = vld [vmem:[%s3 + $0x34] sm:$0xf]
    %v413 = vld [vmem:[%s3 + $0x38] sm:$0xf]
    %v414 = vld [vmem:[%s3 + $0x3c] sm:$0xf]
    %v431 = vunpack.c.l.b16 %v343
    %v432 = vunpack.c.l.b16 %v344
    %v433 = vunpack.c.l.b16 %v345
    %v434 = vunpack.c.l.b16 %v346
    %v435 = vunpack.c.l.b16 %v347
    %v436 = vunpack.c.l.b16 %v348
    %v437 = vunpack.c.l.b16 %v349
    %v438 = vunpack.c.l.b16 %v350
    %v439 = vunpack.c.l.b16 %v351
    %v440 = vunpack.c.l.b16 %v352
    %v441 = vunpack.c.l.b16 %v353
    %v442 = vunpack.c.l.b16 %v354
    %v443 = vunpack.c.l.b16 %v355
    %v444 = vunpack.c.l.b16 %v356
    %v445 = vunpack.c.l.b16 %v357
    %v446 = vunpack.c.l.b16 %v358
    %v447 = vpack.c.b16 %v432, %v431
    %v448 = vpack.c.b16 %v434, %v433
    %v449 = vpack.c.b16 %v436, %v435
    %v450 = vpack.c.b16 %v438, %v437
    %v451 = vpack.c.b16 %v440, %v439
    %v452 = vpack.c.b16 %v442, %v441
    %v453 = vpack.c.b16 %v444, %v443
    %v454 = vpack.c.b16 %v446, %v445
    %v479 = vunpack.c.l.b16 %v399
    %v480 = vunpack.c.l.b16 %v400
    %v481 = vunpack.c.l.b16 %v401
    %v482 = vunpack.c.l.b16 %v402
    %v483 = vunpack.c.l.b16 %v403
    %v484 = vunpack.c.l.b16 %v404
    %v485 = vunpack.c.l.b16 %v405
    %v486 = vunpack.c.l.b16 %v406
    %v487 = vunpack.c.l.b16 %v407
    %v488 = vunpack.c.l.b16 %v408
    %v489 = vunpack.c.l.b16 %v409
    %v490 = vunpack.c.l.b16 %v410
    %v491 = vunpack.c.l.b16 %v411
    %v492 = vunpack.c.l.b16 %v412
    %v493 = vunpack.c.l.b16 %v413
    %v494 = vunpack.c.l.b16 %v414
    %v495 = vpack.c.b16 %v480, %v479
    %v496 = vpack.c.b16 %v482, %v481
    %v497 = vpack.c.b16 %v484, %v483
    %v498 = vpack.c.b16 %v486, %v485
    %v499 = vpack.c.b16 %v488, %v487
    %v500 = vpack.c.b16 %v490, %v489
    %v501 = vpack.c.b16 %v492, %v491
    %v502 = vpack.c.b16 %v494, %v493
    %511 = vmatprep.subr.bf16.mxu0 0
    %512 = vmatpush1.bf16.msra.mxu0 %v495
    %513 = vmatprep.subr.bf16.mxu0 0
    %514 = vmatpush1.bf16.msra.mxu0 %v496
    %515 = vmatprep.subr.bf16.mxu0 0
    %516 = vmatpush1.bf16.msra.mxu0 %v497
    %517 = vmatprep.subr.bf16.mxu0 0
    %518 = vmatpush1.bf16.msra.mxu0 %v498
    %519 = vmatprep.subr.bf16.mxu0 0
    %520 = vmatpush1.bf16.msra.mxu0 %v499
    %521 = vmatprep.subr.bf16.mxu0 0
    %522 = vmatpush1.bf16.msra.mxu0 %v500
    %523 = vmatprep.subr.bf16.mxu0 0
    %524 = vmatpush1.bf16.msra.mxu0 %v501
    %525 = vmatprep.subr.bf16.mxu0 0
    %526 = vmatpush1.bf16.msra.mxu0 %v502
    %527 = vmatprep.subr.bf16.mxu0 0
    %528 = vmatpush1.bf16.msra.mxu0 0
    %529 = vmatprep.subr.bf16.mxu0 0
    %530 = vmatpush1.bf16.msra.mxu0 0
    %531 = vmatprep.subr.bf16.mxu0 0
    %532 = vmatpush1.bf16.msra.mxu0 0
    %533 = vmatprep.subr.bf16.mxu0 0
    %534 = vmatpush1.bf16.msra.mxu0 0
    %535 = vmatprep.subr.bf16.mxu0 0
    %536 = vmatpush1.bf16.msra.mxu0 0
    %537 = vmatprep.subr.bf16.mxu0 0
    %538 = vmatpush1.bf16.msra.mxu0 0
    %539 = vmatprep.subr.bf16.mxu0 0
    %540 = vmatpush1.bf16.msra.mxu0 0
    %541 = vmatprep.subr.bf16.mxu0 0
    %542 = vmatpush1.bf16.msra.mxu0 0
    %543 = vmatprep.mubr.bf16.mxu0 0
    %544 = vmatmul.mubr.bf16.gmra.mrb[0].mxu0 %v447
    %v545 = vpop.f32.mrb[0].mxu0
    %v546 = vadd.f32 0.0, %v545
    %v547 = vpop.f32.mrb[0].mxu0
    %v548 = vpop.f32.mrb[0].mxu0
    %v549 = vadd.f32 0.0, %v548
    %v550 = vpop.f32.mrb[0].mxu0
    %551 = vmatprep.mubr.bf16.mxu0 0
    %552 = vmatmul.mubr.bf16.gmra.mrb[0].mxu0 %v448
    %v553 = vpop.f32.mrb[0].mxu0
    %v554 = vadd.f32 0.0, %v553
    %v555 = vpop.f32.mrb[0].mxu0
    %v556 = vpop.f32.mrb[0].mxu0
    %v557 = vadd.f32 0.0, %v556
    %v558 = vpop.f32.mrb[0].mxu0
    %559 = vmatprep.mubr.bf16.mxu0 0
    %560 = vmatmul.mubr.bf16.gmra.mrb[0].mxu0 %v449
    %v561 = vpop.f32.mrb[0].mxu0
    %v562 = vadd.f32 0.0, %v561
    %v563 = vpop.f32.mrb[0].mxu0
    %v564 = vpop.f32.mrb[0].mxu0
    %v565 = vadd.f32 0.0, %v564
    %v566 = vpop.f32.mrb[0].mxu0
    %567 = vmatprep.mubr.bf16.mxu0 0
    %568 = vmatmul.mubr.bf16.gmra.mrb[0].mxu0 %v450
    %v569 = vpop.f32.mrb[0].mxu0
    %v570 = vadd.f32 0.0, %v569
    %v571 = vpop.f32.mrb[0].mxu0
    %v572 = vpop.f32.mrb[0].mxu0
    %v573 = vadd.f32 0.0, %v572
    %v574 = vpop.f32.mrb[0].mxu0
    %575 = vmatprep.mubr.bf16.mxu0 0
    %576 = vmatmul.mubr.bf16.gmra.mrb[0].mxu0 %v451
    %v577 = vpop.f32.mrb[0].mxu0
    %v578 = vadd.f32 0.0, %v577
    %v579 = vpop.f32.mrb[0].mxu0
    %v580 = vpop.f32.mrb[0].mxu0
    %v581 = vadd.f32 0.0, %v580
    %v582 = vpop.f32.mrb[0].mxu0
    %583 = vmatprep.mubr.bf16.mxu0 0
    %584 = vmatmul.mubr.bf16.gmra.mrb[0].mxu0 %v452
    %v585 = vpop.f32.mrb[0].mxu0
    %v586 = vadd.f32 0.0, %v585
    %v587 = vpop.f32.mrb[0].mxu0
    %v588 = vpop.f32.mrb[0].mxu0
    %v589 = vadd.f32 0.0, %v588
    %v590 = vpop.f32.mrb[0].mxu0
    %591 = vmatprep.mubr.bf16.mxu0 0
    %592 = vmatmul.mubr.bf16.gmra.mrb[0].mxu0 %v453
    %v593 = vpop.f32.mrb[0].mxu0
    %v594 = vadd.f32 0.0, %v593
    %v595 = vpop.f32.mrb[0].mxu0
    %v596 = vpop.f32.mrb[0].mxu0
    %v597 = vadd.f32 0.0, %v596
    %v598 = vpop.f32.mrb[0].mxu0
    %599 = vmatprep.mubr.bf16.mxu0 0
    %600 = vmatmul.mubr.bf16.gmra.mrb[0].mxu0 %v454
    %v601 = vpop.f32.mrb[0].mxu0
    %v602 = vadd.f32 0.0, %v601
    %v603 = vpop.f32.mrb[0].mxu0
    %v604 = vpop.f32.mrb[0].mxu0
    %v605 = vadd.f32 0.0, %v604
    %v606 = vpop.f32.mrb[0].mxu0
    %607 = vdwg.mxu0
    %v624 = vunpack.c.l.b16 %v383
    %v625 = vunpack.c.l.b16 %v384
    %v626 = vunpack.c.l.b16 %v385
    %v627 = vunpack.c.l.b16 %v386
    %v628 = vunpack.c.l.b16 %v387
    %v629 = vunpack.c.l.b16 %v388
    %v630 = vunpack.c.l.b16 %v389
    %v631 = vunpack.c.l.b16 %v390
    %v632 = vunpack.c.l.b16 %v391
    %v633 = vunpack.c.l.b16 %v392
    %v634 = vunpack.c.l.b16 %v393
    %v635 = vunpack.c.l.b16 %v394
    %v636 = vunpack.c.l.b16 %v395
    %v637 = vunpack.c.l.b16 %v396
    %v638 = vunpack.c.l.b16 %v397
    %v639 = vunpack.c.l.b16 %v398
    %v640 = vpack.c.b16 %v625, %v624
    %v641 = vpack.c.b16 %v627, %v626
    %v642 = vpack.c.b16 %v629, %v628
    %v643 = vpack.c.b16 %v631, %v630
    %v644 = vpack.c.b16 %v633, %v632
    %v645 = vpack.c.b16 %v635, %v634
    %v646 = vpack.c.b16 %v637, %v636
    %v647 = vpack.c.b16 %v639, %v638
    %656 = vmatprep.subr.bf16.mxu0 0
    %657 = vmatpush1.bf16.msra.mxu0 %v640
    %658 = vmatprep.subr.bf16.mxu0 0
    %659 = vmatpush1.bf16.msra.mxu0 %v641
    %660 = vmatprep.subr.bf16.mxu0 0
    %661 = vmatpush1.bf16.msra.mxu0 %v642
    %662 = vmatprep.subr.bf16.mxu0 0
    %663 = vmatpush1.bf16.msra.mxu0 %v643
    %664 = vmatprep.subr.bf16.mxu0 0
    %665 = vmatpush1.bf16.msra.mxu0 %v644
    %666 = vmatprep.subr.bf16.mxu0 0
    %667 = vmatpush1.bf16.msra.mxu0 %v645
    %668 = vmatprep.subr.bf16.mxu0 0
    %669 = vmatpush1.bf16.msra.mxu0 %v646
    %670 = vmatprep.subr.bf16.mxu0 0
    %671 = vmatpush1.bf16.msra.mxu0 %v647
    %672 = vmatprep.subr.bf16.mxu0 0
    %673 = vmatpush1.bf16.msra.mxu0 0
    %674 = vmatprep.subr.bf16.mxu0 0
    %675 = vmatpush1.bf16.msra.mxu0 0
    %676 = vmatprep.subr.bf16.mxu0 0
    %677 = vmatpush1.bf16.msra.mxu0 0
    %678 = vmatprep.subr.bf16.mxu0 0
    %679 = vmatpush1.bf16.msra.mxu0 0
    %680 = vmatprep.subr.bf16.mxu0 0
    %681 = vmatpush1.bf16.msra.mxu0 0
    %682 = vmatprep.subr.bf16.mxu0 0
    %683 = vmatpush1.bf16.msra.mxu0 0
    %684 = vmatprep.subr.bf16.mxu0 0
    %685 = vmatpush1.bf16.msra.mxu0 0
    %686 = vmatprep.subr.bf16.mxu0 0
    %687 = vmatpush1.bf16.msra.mxu0 0
    %688 = vmatprep.mubr.bf16.mxu0 0
    %689 = vmatmul.mubr.bf16.gmra.mrb[0].mxu0 %v375
    %v690 = vpop.f32.mrb[0].mxu0
    %v691 = vadd.f32 %v546, %v690
    %v692 = vpop.f32.mrb[0].mxu0
    %v693 = vpop.f32.mrb[0].mxu0
    %v694 = vadd.f32 %v549, %v693
    %v695 = vpop.f32.mrb[0].mxu0
    %696 = vmatprep.mubr.bf16.mxu0 0
    %697 = vmatmul.mubr.bf16.gmra.mrb[0].mxu0 %v376
    %v698 = vpop.f32.mrb[0].mxu0
    %v699 = vadd.f32 %v554, %v698
    %v700 = vpop.f32.mrb[0].mxu0
    %v701 = vpop.f32.mrb[0].mxu0
    %v702 = vadd.f32 %v557, %v701
    %v703 = vpop.f32.mrb[0].mxu0
    %704 = vmatprep.mubr.bf16.mxu0 0
    %705 = vmatmul.mubr.bf16.gmra.mrb[0].mxu0 %v377
    %v706 = vpop.f32.mrb[0].mxu0
    %v707 = vadd.f32 %v562, %v706
    %v708 = vpop.f32.mrb[0].mxu0
    %v709 = vpop.f32.mrb[0].mxu0
    %v710 = vadd.f32 %v565, %v709
    %v711 = vpop.f32.mrb[0].mxu0
    %712 = vmatprep.mubr.bf16.mxu0 0
    %713 = vmatmul.mubr.bf16.gmra.mrb[0].mxu0 %v378
    %v714 = vpop.f32.mrb[0].mxu0
    %v715 = vadd.f32 %v570, %v714
    %v716 = vpop.f32.mrb[0].mxu0
    %v717 = vpop.f32.mrb[0].mxu0
    %v718 = vadd.f32 %v573, %v717
    %v719 = vpop.f32.mrb[0].mxu0
    %720 = vmatprep.mubr.bf16.mxu0 0
    %721 = vmatmul.mubr.bf16.gmra.mrb[0].mxu0 %v379
    %v722 = vpop.f32.mrb[0].mxu0
    %v723 = vadd.f32 %v578, %v722
    %v724 = vpop.f32.mrb[0].mxu0
    %v725 = vpop.f32.mrb[0].mxu0
    %v726 = vadd.f32 %v581, %v725
    %v727 = vpop.f32.mrb[0].mxu0
    %728 = vmatprep.mubr.bf16.mxu0 0
    %729 = vmatmul.mubr.bf16.gmra.mrb[0].mxu0 %v380
    %v730 = vpop.f32.mrb[0].mxu0
    %v731 = vadd.f32 %v586, %v730
    %v732 = vpop.f32.mrb[0].mxu0
    %v733 = vpop.f32.mrb[0].mxu0
    %v734 = vadd.f32 %v589, %v733
    %v735 = vpop.f32.mrb[0].mxu0
    %736 = vmatprep.mubr.bf16.mxu0 0
    %737 = vmatmul.mubr.bf16.gmra.mrb[0].mxu0 %v381
    %v738 = vpop.f32.mrb[0].mxu0
    %v739 = vadd.f32 %v594, %v738
    %v740 = vpop.f32.mrb[0].mxu0
    %v741 = vpop.f32.mrb[0].mxu0
    %v742 = vadd.f32 %v597, %v741
    %v743 = vpop.f32.mrb[0].mxu0
    %744 = vmatprep.mubr.bf16.mxu0 0
    %745 = vmatmul.mubr.bf16.gmra.mrb[0].mxu0 %v382
    %v746 = vpop.f32.mrb[0].mxu0
    %v747 = vadd.f32 %v602, %v746
    %v748 = vpop.f32.mrb[0].mxu0
    %v749 = vpop.f32.mrb[0].mxu0
    %v750 = vadd.f32 %v605, %v749
    %v751 = vpop.f32.mrb[0].mxu0
    %752 = vdwg.mxu0
    %v753 = vld [vmem:[%s4] sm:$0x1]
    %v755 = vlaneseq
    %v756 = vshrl.u32 %v755, 7
    %v757 = vsub.s32 0, %v756
    %v758 = vrot.slane %v753, %v757
    %v760 = vadd.f32 %v691, %v758
    %v761 = vadd.f32 %v694, %v758
    %v762 = vadd.f32 %v699, %v758
    %v763 = vadd.f32 %v702, %v758
    %v764 = vadd.f32 %v707, %v758
    %v765 = vadd.f32 %v710, %v758
    %v766 = vadd.f32 %v715, %v758
    %v767 = vadd.f32 %v718, %v758
    %v768 = vadd.f32 %v723, %v758
    %v769 = vadd.f32 %v726, %v758
    %v770 = vadd.f32 %v731, %v758
    %v771 = vadd.f32 %v734, %v758
    %v772 = vadd.f32 %v739, %v758
    %v773 = vadd.f32 %v742, %v758
    %v774 = vadd.f32 %v747, %v758
    %v775 = vadd.f32 %v750, %v758
    %v776 = vmax.f32 %v760, 0.0
    %v777 = vmax.f32 %v761, 0.0
    %v778 = vmax.f32 %v762, 0.0
    %v779 = vmax.f32 %v763, 0.0
    %v780 = vmax.f32 %v764, 0.0
    %v781 = vmax.f32 %v765, 0.0
    %v782 = vmax.f32 %v766, 0.0
    %v783 = vmax.f32 %v767, 0.0
    %v784 = vmax.f32 %v768, 0.0
    %v785 = vmax.f32 %v769, 0.0
    %v786 = vmax.f32 %v770, 0.0
    %v787 = vmax.f32 %v771, 0.0
    %v788 = vmax.f32 %v772, 0.0
    %v789 = vmax.f32 %v773, 0.0
    %v790 = vmax.f32 %v774, 0.0
    %v791 = vmax.f32 %v775, 0.0
    %v792 = vpack.c.bf16 %v777, %v776
    %v793 = vpack.c.bf16 %v779, %v778
    %v794 = vpack.c.bf16 %v781, %v780
    %v795 = vpack.c.bf16 %v783, %v782
    %v796 = vpack.c.bf16 %v785, %v784
    %v797 = vpack.c.bf16 %v787, %v786
    %v798 = vpack.c.bf16 %v789, %v788
    %v799 = vpack.c.bf16 %v791, %v790
    %v808 = vunpack.c.l.b16 %v792
    %v809 = vunpack.c.h.b16 %v792
    %v810 = vunpack.c.l.b16 %v793
    %v811 = vunpack.c.h.b16 %v793
    %v812 = vunpack.c.l.b16 %v794
    %v813 = vunpack.c.h.b16 %v794
    %v814 = vunpack.c.l.b16 %v795
    %v815 = vunpack.c.h.b16 %v795
    %v816 = vunpack.c.l.b16 %v796
    %v817 = vunpack.c.h.b16 %v796
    %v818 = vunpack.c.l.b16 %v797
    %v819 = vunpack.c.h.b16 %v797
    %v820 = vunpack.c.l.b16 %v798
    %v821 = vunpack.c.h.b16 %v798
    %v822 = vunpack.c.l.b16 %v799
    %v823 = vunpack.c.h.b16 %v799
    %v824 = vpack.c.b16 %v808, %v808
    %v825 = vpack.c.b16 %v809, %v809
    %v826 = vpack.c.b16 %v810, %v810
    %v827 = vpack.c.b16 %v811, %v811
    %v828 = vpack.c.b16 %v812, %v812
    %v829 = vpack.c.b16 %v813, %v813
    %v830 = vpack.c.b16 %v814, %v814
    %v831 = vpack.c.b16 %v815, %v815
    %v832 = vpack.c.b16 %v816, %v816
    %v833 = vpack.c.b16 %v817, %v817
    %v834 = vpack.c.b16 %v818, %v818
    %v835 = vpack.c.b16 %v819, %v819
    %v836 = vpack.c.b16 %v820, %v820
    %v837 = vpack.c.b16 %v821, %v821
    %v838 = vpack.c.b16 %v822, %v822
    %v839 = vpack.c.b16 %v823, %v823
    %856 = vst [vmem:[%s5] sm:$0xf] %v824
    %857 = vst [vmem:[%s5 + $0x4] sm:$0xf] %v825
    %858 = vst [vmem:[%s5 + $0x8] sm:$0xf] %v826
    %859 = vst [vmem:[%s5 + $0xc] sm:$0xf] %v827
    %860 = vst [vmem:[%s5 + $0x10] sm:$0xf] %v828
    %861 = vst [vmem:[%s5 + $0x14] sm:$0xf] %v829
    %862 = vst [vmem:[%s5 + $0x18] sm:$0xf] %v830
    %863 = vst [vmem:[%s5 + $0x1c] sm:$0xf] %v831
    %864 = vst [vmem:[%s5 + $0x20] sm:$0xf] %v832
    %865 = vst [vmem:[%s5 + $0x24] sm:$0xf] %v833
    %866 = vst [vmem:[%s5 + $0x28] sm:$0xf] %v834
    %867 = vst [vmem:[%s5 + $0x2c] sm:$0xf] %v835
    %868 = vst [vmem:[%s5 + $0x30] sm:$0xf] %v836
    %869 = vst [vmem:[%s5 + $0x34] sm:$0xf] %v837
    %870 = vst [vmem:[%s5 + $0x38] sm:$0xf] %v838
    %871 = vst [vmem:[%s5 + $0x3c] sm:$0xf] %v839
  $region29: #{vanilla_graph_conv_forward.4} parent=0 // pred_fallthru
    _
  // Predicated region
  $region30: #{vanilla_graph_conv_forward.4} parent=0 // pred_check
    _
  $region31: #{vanilla_graph_conv_forward.4} parent=0 // pred_check_branch
    %873 = sbr.rel (0) target = $region33
  $region32: #{vanilla_graph_conv_forward.4} parent=0 // pred_region
    _
  $region33: #{vanilla_graph_conv_forward.4} parent=0 // pred_fallthru
    _
  // Predicated region
  $region34: #{vanilla_graph_conv_forward.4} parent=0 // pred_check
    _
  $region35: #{vanilla_graph_conv_forward.4} parent=0 // pred_check_branch
    %875 = sbr.rel (0) target = $region37
  $region36: #{vanilla_graph_conv_forward.4} parent=0 // pred_region
    _
  $region37: #{vanilla_graph_conv_forward.4} parent=0 // pred_fallthru
    _

</llo_original>
